<compile_context>
chip_gen: v7x
topology: tpu7x:2x2x1
jax: 0.10.0
libtpu: 0.0.40
codegen_flags: <defaults>
</compile_context>

<pallas_src>
import functools

import jax
import jax.numpy as jnp
import numpy as np
from jax.experimental import pallas as pl
from jax.experimental.pallas import tpu as pltpu


def _round_up(x, m):
    return (x + m - 1) // m * m


def _vmem_limit_bytes(default=48 * 1024 * 1024):
    """Per-generation VMEM limit: ~85% of per-core capacity when queryable
    (=> ~108 MiB on v5e/v6e, ~54 MiB on v7x), else a safe 48 MiB fallback."""
    try:
        info = pltpu.get_tpu_info()
        for name in ("vmem_capacity_bytes", "vmem_size_bytes", "vmem_bytes"):
            cap = getattr(info, name, None)
            if cap:
                return int(cap * 0.85)
    except Exception:
        pass
    return default


def _pick_time_chunk(T, Bp, Hp, vmem_limit, max_chunk):
    """Largest time chunk whose VMEM footprint (double-buffered bf16 gate+out
    chunks + one W_hh copy + state scratch + headroom) fits the budget."""
    fixed = Hp * 4 * Hp * 2            # W_hh bf16, single copy per core
    fixed += 2 * Bp * Hp * 4           # h/c f32 cross-chunk state scratch
    fixed += 2 * 1024 * 1024           # headroom for internal scratch
    per_step = 2 * Bp * 4 * Hp * 2     # gate chunk, bf16, double-buffered
    per_step += 2 * Bp * Hp * 2        # out chunk, bf16, double-buffered
    tc = (vmem_limit - fixed) // per_step
    return int(max(1, min(tc, max_chunk, T)))


def _pad_gate_rows(w, H, Hp):
    """Pad the stacked-gate (4*H) leading axis to 4*Hp, per gate, with zeros."""
    shape = w.shape
    w4 = w.reshape((4, H) + shape[1:])
    pad = [(0, 0)] * w4.ndim
    pad[1] = (0, Hp - H)
    w4 = jnp.pad(w4, pad)
    return w4.reshape((4 * Hp,) + shape[1:])


def _bilstm_kernel(Tc, Hp,
                   gates_ref,      # [Tc, Bp, 4Hp] bf16 (this direction's chunk)
                   whh_hbm,        # [2, Hp, 4Hp] bf16, HBM (pl.ANY)
                   out_ref,        # [Tc, Bp, Hp] bf16
                   whh_vmem,       # [Hp, 4Hp] bf16 VMEM scratch (single copy)
                   dma_sem,        # (1,) DMA semaphore
                   h_scr, c_scr):  # [Bp, Hp] f32 cross-chunk state
    """Grid = (direction, time_chunk).  The direction axis is 'parallel' (one
    TensorCore per direction on v7x); the chunk axis is sequential.  Forward
    (d=0) walks chunks/steps in increasing time, backward (d=1) consumes the
    same precomputed gate stream through reversed chunk order + reversed local
    order.  Only the serial part runs here: per timestep one [Bp,Hp]x[Hp,4Hp]
    bf16 matmul on the hidden state plus the f32 gate nonlinearities."""
    d = pl.program_id(0)     # 0 = forward, 1 = backward
    tc = pl.program_id(1)    # time-chunk counter within this direction

    @pl.when(tc == 0)
    def _init():
        # Load this direction's recurrent weights ONCE into single-buffered
        # VMEM scratch (no per-chunk re-fetch, no double-buffer copies).
        # TODO(synk): hide this one-time DMA behind the hoisted gate GEMM via a
        # cross-call prefetch (P10) for stacked-LSTM / short-T workloads.
        cp = pltpu.make_async_copy(whh_hbm.at[d], whh_vmem, dma_sem.at[0])
        cp.start()
        cp.wait()
        h_scr[...] = jnp.zeros_like(h_scr)
        c_scr[...] = jnp.zeros_like(c_scr)

    def step(s, carry):
        h, c = carry                                    # h: bf16, c: f32
        # forward walks the chunk 0..Tc-1; backward walks it Tc-1..0
        idx = s + d * (Tc - 1 - 2 * s)
        g_in = gates_ref[idx].astype(jnp.float32)       # [Bp, 4Hp]
        # Serial part only: h @ W_hh (bf16 on the MXU, f32 accumulation).
        gates = g_in + jnp.dot(h, whh_vmem[...],
                               preferred_element_type=jnp.float32)
        # Hp is a multiple of 128 -> lane-aligned gate slices (no relayout).
        i = jax.nn.sigmoid(gates[:, 0 * Hp:1 * Hp])
        f = jax.nn.sigmoid(gates[:, 1 * Hp:2 * Hp])
        gg = jnp.tanh(gates[:, 2 * Hp:3 * Hp])
        o = jax.nn.sigmoid(gates[:, 3 * Hp:4 * Hp])
        c_new = f * c + i * gg
        h_new = (o * jnp.tanh(c_new)).astype(jnp.bfloat16)
        out_ref[idx] = h_new
        return h_new, c_new

    # (h, c) live in vregs across the chunk; spill to scratch once per chunk.
    h0 = h_scr[...].astype(jnp.bfloat16)
    c0 = c_scr[...]
    h_fin, c_fin = jax.lax.fori_loop(0, Tc, step, (h0, c0),
                                     unroll=min(8, Tc))
    h_scr[...] = h_fin.astype(jnp.float32)
    c_scr[...] = c_fin


def bilstm_forward(x, params, *, max_time_chunk=64):
    """x: [B, T, I] (batch_first). Returns [B, T, 2H] (bidirectional outputs)."""
    B, T, I = x.shape
    H = params["w_hh_f"].shape[1]                    # w_hh: [4H, H]

    Bp = _round_up(B, 8)                             # sublane tile
    Hp = _round_up(H, 128)                           # lane tile
    vmem_limit = _vmem_limit_bytes()
    Tc = _pick_time_chunk(T, Bp, Hp, vmem_limit, max_time_chunk)
    n_chunks = pl.cdiv(T, Tc)
    Tp = n_chunks * Tc

    # Fold the bias into the hoisted GEMM: ones column on x, bias column on
    # W_ih.  Zero-pad batch/time AFTER the concat so every padded row (batch
    # or time) produces exactly-zero gates -> padded (h, c) stay 0, which keeps
    # the backward direction crossing the padded time tail exact.
    ones = jnp.ones((B, T, 1), jnp.float32)
    x_aug = jnp.concatenate([x.astype(jnp.float32), ones], axis=-1)
    x_aug = jnp.pad(x_aug, ((0, Bp - B), (0, Tp - T), (0, 0)))      # [Bp,Tp,I+1]
    x_tm = jnp.transpose(x_aug, (1, 0, 2)).astype(jnp.bfloat16)     # [Tp,Bp,I+1]

    def prep_dir(wih, whh, bih, bhh):
        wih_p = _pad_gate_rows(wih, H, Hp)                           # [4Hp, I]
        b_p = _pad_gate_rows((bih + bhh)[:, None].astype(jnp.float32),
                             H, Hp)                                  # [4Hp, 1]
        wih_aug = jnp.concatenate([wih_p, b_p], axis=1)              # [4Hp, I+1]
        whh_p = _pad_gate_rows(whh, H, Hp)                           # [4Hp, H]
        whh_p = jnp.pad(whh_p, ((0, 0), (0, Hp - H)))                # [4Hp, Hp]
        return wih_aug, whh_p.T                                      # [Hp, 4Hp]

    wih_f, whh_f = prep_dir(params["w_ih_f"], params["w_hh_f"],
                            params["b_ih_f"], params["b_hh_f"])
    wih_b, whh_b = prep_dir(params["w_ih_b"], params["w_hh_b"],
                            params["b_ih_b"], params["b_hh_b"])
    wih_all = jnp.stack([wih_f, wih_b]).astype(jnp.bfloat16)         # [2,4Hp,I+1]
    whh_all = jnp.stack([whh_f, whh_b]).astype(jnp.bfloat16)         # [2,Hp,4Hp]

    # Hoisted input projection for both directions in one bf16 GEMM.  Direction
    # is a dot_general batch dim, so the natural output order is already the
    # Pallas layout [dir, T, B, 4Hp] -- no extra transpose pass.  Stored bf16.
    x_d = jnp.broadcast_to(x_tm[None], (2,) + x_tm.shape)            # [2,Tp,Bp,I+1]
    gates = jnp.einsum("dtbi,dgi->dtbg", x_d, wih_all,
                       preferred_element_type=jnp.float32)
    gates = gates.astype(jnp.bfloat16)                               # [2,Tp,Bp,4Hp]

    # TODO(synk): for H >= ~1536, quantize W_hh to int8 (v5e/v6e) / fp8 (v7x)
    # with per-gate f32 scales to halve VMEM residency and MXU push count.

    def chunk_idx(d, tc):        # fwd: tc ; bwd: n_chunks-1-tc (reverse order)
        return tc + d * (n_chunks - 1 - 2 * tc)

    out = pl.pallas_call(
        functools.partial(_bilstm_kernel, Tc, Hp),
        out_shape=jax.ShapeDtypeStruct((2, Tp, Bp, Hp), jnp.bfloat16),
        grid_spec=pltpu.PrefetchScalarGridSpec(
            num_scalar_prefetch=0,
            grid=(2, n_chunks),
            in_specs=[
                # this direction's gate chunk (bf16, time-major, lane-dense)
                pl.BlockSpec((None, Tc, Bp, 4 * Hp),
                             lambda d, tc: (d, chunk_idx(d, tc), 0, 0)),
                # recurrent weights stay in HBM; DMA'd once per direction
                pl.BlockSpec(memory_space=pl.ANY),
            ],
            out_specs=pl.BlockSpec((None, Tc, Bp, Hp),
                                   lambda d, tc: (d, chunk_idx(d, tc), 0, 0)),
            scratch_shapes=[
                pltpu.VMEM((Hp, 4 * Hp), jnp.bfloat16),   # W_hh (one copy/core)
                pltpu.SemaphoreType.DMA((1,)),
                pltpu.VMEM((Bp, Hp), jnp.float32),        # h (cross-chunk)
                pltpu.VMEM((Bp, Hp), jnp.float32),        # c (cross-chunk)
            ],
        ),
        compiler_params=pltpu.CompilerParams(
            dimension_semantics=("parallel", "arbitrary"),
            vmem_limit_bytes=vmem_limit),
    )(gates, whh_all)

    # [2, Tp, Bp, Hp] -> [B, T, 2H]  (torch order: [..., :H]=fwd, [..., H:]=bwd)
    out = out[:, :T, :B, :H]
    out = jnp.transpose(out, (2, 1, 0, 3)).reshape(B, T, 2 * H)
    # return_hn=False in the module default, so only the sequence output is
    # returned (h_n would simply be out[:, -1, :H] / out[:, 0, H:]).
    return out.astype(jnp.float32)


def bilstm_ref(x, params):
    """Pure-JAX reference matching torch.nn.LSTM(bidirectional=True)."""
    B, T, I = x.shape
    H = params["w_hh_f"].shape[1]

    def run(x_seq, wih, whh, bih, bhh):
        def step(carry, xt):
            h, c = carry
            gates = xt @ wih.T + h @ whh.T + bih + bhh
            i = jax.nn.sigmoid(gates[:, :H])
            f = jax.nn.sigmoid(gates[:, H:2 * H])
            g = jnp.tanh(gates[:, 2 * H:3 * H])
            o = jax.nn.sigmoid(gates[:, 3 * H:])
            c = f * c + i * g
            h = o * jnp.tanh(c)
            return (h, c), h
        h0 = jnp.zeros((B, H), jnp.float32)
        c0 = jnp.zeros((B, H), jnp.float32)
        _, hs = jax.lax.scan(step, (h0, c0), jnp.transpose(x_seq, (1, 0, 2)))
        return jnp.transpose(hs, (1, 0, 2))

    out_f = run(x, params["w_ih_f"], params["w_hh_f"],
                params["b_ih_f"], params["b_hh_f"])
    out_b = run(x[:, ::-1], params["w_ih_b"], params["w_hh_b"],
                params["b_ih_b"], params["b_hh_b"])[:, ::-1]
    return jnp.concatenate([out_f, out_b], axis=-1)


def init_params(key, n_input, n_hidden):
    """Deterministic init mimicking PyTorch's U(-1/sqrt(H), 1/sqrt(H))."""
    k = 1.0 / np.sqrt(n_hidden)
    names_shapes = [
        ("w_ih_f", (4 * n_hidden, n_input)),
        ("w_hh_f", (4 * n_hidden, n_hidden)),
        ("b_ih_f", (4 * n_hidden,)),
        ("b_hh_f", (4 * n_hidden,)),
        ("w_ih_b", (4 * n_hidden, n_input)),
        ("w_hh_b", (4 * n_hidden, n_hidden)),
        ("b_ih_b", (4 * n_hidden,)),
        ("b_hh_b", (4 * n_hidden,)),
    ]
    params = {}
    for name, shape in names_shapes:
        key, sub = jax.random.split(key)
        params[name] = jax.random.uniform(sub, shape, jnp.float32, -k, k)
    return params


if __name__ == "__main__":
    # small shapes: batch=2, seq=8, n_input=16, n_hidden=32
    B, T, I, H = 2, 8, 16, 32
    key = jax.random.PRNGKey(0)
    key_x, key_p = jax.random.split(key)
    x = jax.random.normal(key_x, (B, T, I), jnp.float32)
    params = init_params(key_p, I, H)

    out = jax.block_until_ready(bilstm_forward(x, params))
    ref = jax.block_until_ready(bilstm_ref(x, params))

    assert out.shape == (B, T, 2 * H), out.shape
    # bf16 matmul inputs + bf16 gate/output storage (f32 accumulation & f32 cell
    # state) -> loosened tolerance vs. the f32 reference.
    np.testing.assert_allclose(np.asarray(out), np.asarray(ref),
                               rtol=3e-2, atol=3e-2)
    print("KERNEL_OK")
</pallas_src>

<mosaic_0001>
module attributes {stable_mosaic.version = 11 : i64} {
  func.func @_bilstm_kernel(%arg0: i32, %arg1: i32, %arg2: memref<1x8x8x512xbf16, #tpu.memory_space<vmem>>, %arg3: memref<2x128x512xbf16, #tpu.memory_space<any>>, %arg4: memref<1x8x8x128xbf16, #tpu.memory_space<vmem>>, %arg5: memref<128x512xbf16, #tpu.memory_space<vmem>>, %arg6: memref<1x!tpu.dma_semaphore, #tpu.memory_space<semaphore_mem>>, %arg7: memref<8x128xf32, #tpu.memory_space<vmem>>, %arg8: memref<8x128xf32, #tpu.memory_space<vmem>>) attributes {dimension_semantics = [#tpu.dimension_semantics<parallel>, #tpu.dimension_semantics<arbitrary>], iteration_bounds = array<i64: 2, 1>, scalar_prefetch = 0 : i64, scratch_operands = 4 : i64, tpu.core_type = #tpu.core_type<tc>, window_params = [{transform_indices = @transform_0, window_bounds = array<i64: 1, 8, 8, 512>}, {}, {transform_indices = @transform_2, window_bounds = array<i64: 1, 8, 8, 128>}]} {
    %c0_i32 = arith.constant 0 : i32
    %0 = arith.cmpi eq, %arg1, %c0_i32 : i32
    %1 = arith.extui %0 : i1 to i32
    %c0_i32_0 = arith.constant 0 : i32
    %2 = arith.cmpi ne, %1, %c0_i32_0 : i32
    scf.if %2 {
      %c0_i32_120 = arith.constant 0 : i32
      %c0_i32_121 = arith.constant 0 : i32
      %c0_i32_122 = arith.constant 0 : i32
      %337 = tpu.memref_slice %arg3[%arg0, %c0_i32_121, %c0_i32_122] : memref<2x128x512xbf16, #tpu.memory_space<any>> -> memref<1x128x512xbf16, #tpu.memory_space<any>>
      %338 = tpu.memref_squeeze %337 : memref<1x128x512xbf16, #tpu.memory_space<any>> -> memref<128x512xbf16, #tpu.memory_space<any>>
      %339 = tpu.memref_slice %arg6[%c0_i32_120] : memref<1x!tpu.dma_semaphore, #tpu.memory_space<semaphore_mem>> -> memref<1x!tpu.dma_semaphore, #tpu.memory_space<semaphore_mem>>
      %340 = tpu.memref_squeeze %339 : memref<1x!tpu.dma_semaphore, #tpu.memory_space<semaphore_mem>> -> memref<!tpu.dma_semaphore, #tpu.memory_space<semaphore_mem>>
      tpu.enqueue_dma source(%338 : memref<128x512xbf16, #tpu.memory_space<any>>) target(%arg5 : memref<128x512xbf16, #tpu.memory_space<vmem>>) target_semaphore(%340 : memref<!tpu.dma_semaphore, #tpu.memory_space<semaphore_mem>>)
      %c0_i32_123 = arith.constant 0 : i32
      %c0_i32_124 = arith.constant 0 : i32
      %c0_i32_125 = arith.constant 0 : i32
      %341 = tpu.memref_slice %arg3[%arg0, %c0_i32_124, %c0_i32_125] : memref<2x128x512xbf16, #tpu.memory_space<any>> -> memref<1x128x512xbf16, #tpu.memory_space<any>>
      %342 = tpu.memref_squeeze %341 : memref<1x128x512xbf16, #tpu.memory_space<any>> -> memref<128x512xbf16, #tpu.memory_space<any>>
      %343 = tpu.memref_slice %arg6[%c0_i32_123] : memref<1x!tpu.dma_semaphore, #tpu.memory_space<semaphore_mem>> -> memref<1x!tpu.dma_semaphore, #tpu.memory_space<semaphore_mem>>
      %344 = tpu.memref_squeeze %343 : memref<1x!tpu.dma_semaphore, #tpu.memory_space<semaphore_mem>> -> memref<!tpu.dma_semaphore, #tpu.memory_space<semaphore_mem>>
      tpu.wait_dma2 semaphore(%344 : memref<!tpu.dma_semaphore, #tpu.memory_space<semaphore_mem>>) src(%342 : memref<128x512xbf16, #tpu.memory_space<any>>) dst(%arg5 : memref<128x512xbf16, #tpu.memory_space<vmem>>)
      %cst_126 = arith.constant 0.000000e+00 : f32
      %345 = vector.broadcast %cst_126 : f32 to vector<8x128xf32>
      %c0_127 = arith.constant 0 : index
      %c0_128 = arith.constant 0 : index
      %346 = vector.load %arg7[%c0_127, %c0_128] : memref<8x128xf32, #tpu.memory_space<vmem>>, vector<8x128xf32>
      tpu.vector_store %arg7[%c0_127, %c0_128], %345 {strides = array<i32>} : memref<8x128xf32, #tpu.memory_space<vmem>>, vector<8x128xf32>,
      %cst_129 = arith.constant 0.000000e+00 : f32
      %347 = vector.broadcast %cst_129 : f32 to vector<8x128xf32>
      %c0_130 = arith.constant 0 : index
      %c0_131 = arith.constant 0 : index
      %348 = vector.load %arg8[%c0_130, %c0_131] : memref<8x128xf32, #tpu.memory_space<vmem>>, vector<8x128xf32>
      tpu.vector_store %arg8[%c0_130, %c0_131], %347 {strides = array<i32>} : memref<8x128xf32, #tpu.memory_space<vmem>>, vector<8x128xf32>,
    } else {
    }
    %c0 = arith.constant 0 : index
    %c0_1 = arith.constant 0 : index
    %3 = vector.load %arg7[%c0, %c0_1] : memref<8x128xf32, #tpu.memory_space<vmem>>, vector<8x128xf32>
    %4 = arith.truncf %3 : vector<8x128xf32> to vector<8x128xbf16>
    %c0_2 = arith.constant 0 : index
    %c0_3 = arith.constant 0 : index
    %5 = vector.load %arg8[%c0_2, %c0_3] : memref<8x128xf32, #tpu.memory_space<vmem>>, vector<8x128xf32>
    %c0_i32_4 = arith.constant 0 : i32
    %c2_i32 = arith.constant 2 : i32
    %6 = arith.muli %c2_i32, %c0_i32_4 : i32
    %c7_i32 = arith.constant 7 : i32
    %7 = arith.subi %c7_i32, %6 : i32
    %8 = arith.muli %arg0, %7 : i32
    %9 = arith.addi %c0_i32_4, %8 : i32
    %c0_5 = arith.constant 0 : index
    %10 = arith.index_cast %9 : i32 to index
    %c0_6 = arith.constant 0 : index
    %c0_7 = arith.constant 0 : index
    %11 = vector.load %arg2[%c0_5, %10, %c0_6, %c0_7] : memref<1x8x8x512xbf16, #tpu.memory_space<vmem>>, vector<1x1x8x512xbf16>
    %12 = vector.shape_cast %11 : vector<1x1x8x512xbf16> to vector<8x512xbf16>
    %13 = arith.extf %12 : vector<8x512xbf16> to vector<8x512xf32>
    %c0_8 = arith.constant 0 : index
    %c0_9 = arith.constant 0 : index
    %14 = vector.load %arg5[%c0_8, %c0_9] : memref<128x512xbf16, #tpu.memory_space<vmem>>, vector<128x512xbf16>
    %cst = arith.constant dense<0.000000e+00> : vector<8x512xf32>
    %15 = tpu.matmul %4, %14, %cst {dimension_numbers = #tpu.dot_dimension_numbers<[1], [0], [0], [1], [0, 0, 1, 1], [], []>} : vector<8x128xbf16>, vector<128x512xbf16>, vector<8x512xf32> -> vector<8x512xf32>
    %16 = arith.addf %13, %15 : vector<8x512xf32>
    %17 = vector.extract_strided_slice %16 {offsets = [0, 0], sizes = [8, 128], strides = [1, 1]} : vector<8x512xf32> to vector<8x128xf32>
    %18 = arith.negf %17 : vector<8x128xf32>
    %19 = math.exp %18 : vector<8x128xf32>
    %cst_10 = arith.constant 1.000000e+00 : f32
    %20 = vector.broadcast %cst_10 : f32 to vector<8x128xf32>
    %21 = arith.addf %20, %19 : vector<8x128xf32>
    %22 = arith.divf %20, %21 : vector<8x128xf32>
    %23 = vector.extract_strided_slice %16 {offsets = [0, 128], sizes = [8, 128], strides = [1, 1]} : vector<8x512xf32> to vector<8x128xf32>
    %24 = arith.negf %23 : vector<8x128xf32>
    %25 = math.exp %24 : vector<8x128xf32>
    %cst_11 = arith.constant 1.000000e+00 : f32
    %26 = vector.broadcast %cst_11 : f32 to vector<8x128xf32>
    %27 = arith.addf %26, %25 : vector<8x128xf32>
    %28 = arith.divf %26, %27 : vector<8x128xf32>
    %29 = vector.extract_strided_slice %16 {offsets = [0, 256], sizes = [8, 128], strides = [1, 1]} : vector<8x512xf32> to vector<8x128xf32>
    %30 = math.tanh %29 : vector<8x128xf32>
    %31 = vector.extract_strided_slice %16 {offsets = [0, 384], sizes = [8, 128], strides = [1, 1]} : vector<8x512xf32> to vector<8x128xf32>
    %32 = arith.negf %31 : vector<8x128xf32>
    %33 = math.exp %32 : vector<8x128xf32>
    %cst_12 = arith.constant 1.000000e+00 : f32
    %34 = vector.broadcast %cst_12 : f32 to vector<8x128xf32>
    %35 = arith.addf %34, %33 : vector<8x128xf32>
    %36 = arith.divf %34, %35 : vector<8x128xf32>
    %37 = arith.mulf %28, %5 : vector<8x128xf32>
    %38 = arith.mulf %22, %30 : vector<8x128xf32>
    %39 = arith.addf %37, %38 : vector<8x128xf32>
    %40 = math.tanh %39 : vector<8x128xf32>
    %41 = arith.mulf %36, %40 : vector<8x128xf32>
    %42 = arith.truncf %41 : vector<8x128xf32> to vector<8x128xbf16>
    %c0_13 = arith.constant 0 : index
    %43 = arith.index_cast %9 : i32 to index
    %c0_14 = arith.constant 0 : index
    %c0_15 = arith.constant 0 : index
    %44 = vector.load %arg4[%c0_13, %43, %c0_14, %c0_15] : memref<1x8x8x128xbf16, #tpu.memory_space<vmem>>, vector<1x1x8x128xbf16>
    %45 = vector.shape_cast %44 : vector<1x1x8x128xbf16> to vector<8x128xbf16>
    %46 = vector.shape_cast %42 : vector<8x128xbf16> to vector<1x1x8x128xbf16>
    tpu.vector_store %arg4[%c0_13, %43, %c0_14, %c0_15], %46 {strides = array<i32>} : memref<1x8x8x128xbf16, #tpu.memory_space<vmem>>, vector<1x1x8x128xbf16>,
    %c1_i32 = arith.constant 1 : i32
    %c2_i32_16 = arith.constant 2 : i32
    %47 = arith.muli %c2_i32_16, %c1_i32 : i32
    %c7_i32_17 = arith.constant 7 : i32
    %48 = arith.subi %c7_i32_17, %47 : i32
    %49 = arith.muli %arg0, %48 : i32
    %50 = arith.addi %c1_i32, %49 : i32
    %c0_18 = arith.constant 0 : index
    %51 = arith.index_cast %50 : i32 to index
    %c0_19 = arith.constant 0 : index
    %c0_20 = arith.constant 0 : index
    %52 = vector.load %arg2[%c0_18, %51, %c0_19, %c0_20] : memref<1x8x8x512xbf16, #tpu.memory_space<vmem>>, vector<1x1x8x512xbf16>
    %53 = vector.shape_cast %52 : vector<1x1x8x512xbf16> to vector<8x512xbf16>
    %54 = arith.extf %53 : vector<8x512xbf16> to vector<8x512xf32>
    %c0_21 = arith.constant 0 : index
    %c0_22 = arith.constant 0 : index
    %55 = vector.load %arg5[%c0_21, %c0_22] : memref<128x512xbf16, #tpu.memory_space<vmem>>, vector<128x512xbf16>
    %cst_23 = arith.constant dense<0.000000e+00> : vector<8x512xf32>
    %56 = tpu.matmul %42, %55, %cst_23 {dimension_numbers = #tpu.dot_dimension_numbers<[1], [0], [0], [1], [0, 0, 1, 1], [], []>} : vector<8x128xbf16>, vector<128x512xbf16>, vector<8x512xf32> -> vector<8x512xf32>
    %57 = arith.addf %54, %56 : vector<8x512xf32>
    %58 = vector.extract_strided_slice %57 {offsets = [0, 0], sizes = [8, 128], strides = [1, 1]} : vector<8x512xf32> to vector<8x128xf32>
    %59 = arith.negf %58 : vector<8x128xf32>
    %60 = math.exp %59 : vector<8x128xf32>
    %cst_24 = arith.constant 1.000000e+00 : f32
    %61 = vector.broadcast %cst_24 : f32 to vector<8x128xf32>
    %62 = arith.addf %61, %60 : vector<8x128xf32>
    %63 = arith.divf %61, %62 : vector<8x128xf32>
    %64 = vector.extract_strided_slice %57 {offsets = [0, 128], sizes = [8, 128], strides = [1, 1]} : vector<8x512xf32> to vector<8x128xf32>
    %65 = arith.negf %64 : vector<8x128xf32>
    %66 = math.exp %65 : vector<8x128xf32>
    %cst_25 = arith.constant 1.000000e+00 : f32
    %67 = vector.broadcast %cst_25 : f32 to vector<8x128xf32>
    %68 = arith.addf %67, %66 : vector<8x128xf32>
    %69 = arith.divf %67, %68 : vector<8x128xf32>
    %70 = vector.extract_strided_slice %57 {offsets = [0, 256], sizes = [8, 128], strides = [1, 1]} : vector<8x512xf32> to vector<8x128xf32>
    %71 = math.tanh %70 : vector<8x128xf32>
    %72 = vector.extract_strided_slice %57 {offsets = [0, 384], sizes = [8, 128], strides = [1, 1]} : vector<8x512xf32> to vector<8x128xf32>
    %73 = arith.negf %72 : vector<8x128xf32>
    %74 = math.exp %73 : vector<8x128xf32>
    %cst_26 = arith.constant 1.000000e+00 : f32
    %75 = vector.broadcast %cst_26 : f32 to vector<8x128xf32>
    %76 = arith.addf %75, %74 : vector<8x128xf32>
    %77 = arith.divf %75, %76 : vector<8x128xf32>
    %78 = arith.mulf %69, %39 : vector<8x128xf32>
    %79 = arith.mulf %63, %71 : vector<8x128xf32>
    %80 = arith.addf %78, %79 : vector<8x128xf32>
    %81 = math.tanh %80 : vector<8x128xf32>
    %82 = arith.mulf %77, %81 : vector<8x128xf32>
    %83 = arith.truncf %82 : vector<8x128xf32> to vector<8x128xbf16>
    %c0_27 = arith.constant 0 : index
    %84 = arith.index_cast %50 : i32 to index
    %c0_28 = arith.constant 0 : index
    %c0_29 = arith.constant 0 : index
    %85 = vector.load %arg4[%c0_27, %84, %c0_28, %c0_29] : memref<1x8x8x128xbf16, #tpu.memory_space<vmem>>, vector<1x1x8x128xbf16>
    %86 = vector.shape_cast %85 : vector<1x1x8x128xbf16> to vector<8x128xbf16>
    %87 = vector.shape_cast %83 : vector<8x128xbf16> to vector<1x1x8x128xbf16>
    tpu.vector_store %arg4[%c0_27, %84, %c0_28, %c0_29], %87 {strides = array<i32>} : memref<1x8x8x128xbf16, #tpu.memory_space<vmem>>, vector<1x1x8x128xbf16>,
    %c2_i32_30 = arith.constant 2 : i32
    %c2_i32_31 = arith.constant 2 : i32
    %88 = arith.muli %c2_i32_31, %c2_i32_30 : i32
    %c7_i32_32 = arith.constant 7 : i32
    %89 = arith.subi %c7_i32_32, %88 : i32
    %90 = arith.muli %arg0, %89 : i32
    %91 = arith.addi %c2_i32_30, %90 : i32
    %c0_33 = arith.constant 0 : index
    %92 = arith.index_cast %91 : i32 to index
    %c0_34 = arith.constant 0 : index
    %c0_35 = arith.constant 0 : index
    %93 = vector.load %arg2[%c0_33, %92, %c0_34, %c0_35] : memref<1x8x8x512xbf16, #tpu.memory_space<vmem>>, vector<1x1x8x512xbf16>
    %94 = vector.shape_cast %93 : vector<1x1x8x512xbf16> to vector<8x512xbf16>
    %95 = arith.extf %94 : vector<8x512xbf16> to vector<8x512xf32>
    %c0_36 = arith.constant 0 : index
    %c0_37 = arith.constant 0 : index
    %96 = vector.load %arg5[%c0_36, %c0_37] : memref<128x512xbf16, #tpu.memory_space<vmem>>, vector<128x512xbf16>
    %cst_38 = arith.constant dense<0.000000e+00> : vector<8x512xf32>
    %97 = tpu.matmul %83, %96, %cst_38 {dimension_numbers = #tpu.dot_dimension_numbers<[1], [0], [0], [1], [0, 0, 1, 1], [], []>} : vector<8x128xbf16>, vector<128x512xbf16>, vector<8x512xf32> -> vector<8x512xf32>
    %98 = arith.addf %95, %97 : vector<8x512xf32>
    %99 = vector.extract_strided_slice %98 {offsets = [0, 0], sizes = [8, 128], strides = [1, 1]} : vector<8x512xf32> to vector<8x128xf32>
    %100 = arith.negf %99 : vector<8x128xf32>
    %101 = math.exp %100 : vector<8x128xf32>
    %cst_39 = arith.constant 1.000000e+00 : f32
    %102 = vector.broadcast %cst_39 : f32 to vector<8x128xf32>
    %103 = arith.addf %102, %101 : vector<8x128xf32>
    %104 = arith.divf %102, %103 : vector<8x128xf32>
    %105 = vector.extract_strided_slice %98 {offsets = [0, 128], sizes = [8, 128], strides = [1, 1]} : vector<8x512xf32> to vector<8x128xf32>
    %106 = arith.negf %105 : vector<8x128xf32>
    %107 = math.exp %106 : vector<8x128xf32>
    %cst_40 = arith.constant 1.000000e+00 : f32
    %108 = vector.broadcast %cst_40 : f32 to vector<8x128xf32>
    %109 = arith.addf %108, %107 : vector<8x128xf32>
    %110 = arith.divf %108, %109 : vector<8x128xf32>
    %111 = vector.extract_strided_slice %98 {offsets = [0, 256], sizes = [8, 128], strides = [1, 1]} : vector<8x512xf32> to vector<8x128xf32>
    %112 = math.tanh %111 : vector<8x128xf32>
    %113 = vector.extract_strided_slice %98 {offsets = [0, 384], sizes = [8, 128], strides = [1, 1]} : vector<8x512xf32> to vector<8x128xf32>
    %114 = arith.negf %113 : vector<8x128xf32>
    %115 = math.exp %114 : vector<8x128xf32>
    %cst_41 = arith.constant 1.000000e+00 : f32
    %116 = vector.broadcast %cst_41 : f32 to vector<8x128xf32>
    %117 = arith.addf %116, %115 : vector<8x128xf32>
    %118 = arith.divf %116, %117 : vector<8x128xf32>
    %119 = arith.mulf %110, %80 : vector<8x128xf32>
    %120 = arith.mulf %104, %112 : vector<8x128xf32>
    %121 = arith.addf %119, %120 : vector<8x128xf32>
    %122 = math.tanh %121 : vector<8x128xf32>
    %123 = arith.mulf %118, %122 : vector<8x128xf32>
    %124 = arith.truncf %123 : vector<8x128xf32> to vector<8x128xbf16>
    %c0_42 = arith.constant 0 : index
    %125 = arith.index_cast %91 : i32 to index
    %c0_43 = arith.constant 0 : index
    %c0_44 = arith.constant 0 : index
    %126 = vector.load %arg4[%c0_42, %125, %c0_43, %c0_44] : memref<1x8x8x128xbf16, #tpu.memory_space<vmem>>, vector<1x1x8x128xbf16>
    %127 = vector.shape_cast %126 : vector<1x1x8x128xbf16> to vector<8x128xbf16>
    %128 = vector.shape_cast %124 : vector<8x128xbf16> to vector<1x1x8x128xbf16>
    tpu.vector_store %arg4[%c0_42, %125, %c0_43, %c0_44], %128 {strides = array<i32>} : memref<1x8x8x128xbf16, #tpu.memory_space<vmem>>, vector<1x1x8x128xbf16>,
    %c3_i32 = arith.constant 3 : i32
    %c2_i32_45 = arith.constant 2 : i32
    %129 = arith.muli %c2_i32_45, %c3_i32 : i32
    %c7_i32_46 = arith.constant 7 : i32
    %130 = arith.subi %c7_i32_46, %129 : i32
    %131 = arith.muli %arg0, %130 : i32
    %132 = arith.addi %c3_i32, %131 : i32
    %c0_47 = arith.constant 0 : index
    %133 = arith.index_cast %132 : i32 to index
    %c0_48 = arith.constant 0 : index
    %c0_49 = arith.constant 0 : index
    %134 = vector.load %arg2[%c0_47, %133, %c0_48, %c0_49] : memref<1x8x8x512xbf16, #tpu.memory_space<vmem>>, vector<1x1x8x512xbf16>
    %135 = vector.shape_cast %134 : vector<1x1x8x512xbf16> to vector<8x512xbf16>
    %136 = arith.extf %135 : vector<8x512xbf16> to vector<8x512xf32>
    %c0_50 = arith.constant 0 : index
    %c0_51 = arith.constant 0 : index
    %137 = vector.load %arg5[%c0_50, %c0_51] : memref<128x512xbf16, #tpu.memory_space<vmem>>, vector<128x512xbf16>
    %cst_52 = arith.constant dense<0.000000e+00> : vector<8x512xf32>
    %138 = tpu.matmul %124, %137, %cst_52 {dimension_numbers = #tpu.dot_dimension_numbers<[1], [0], [0], [1], [0, 0, 1, 1], [], []>} : vector<8x128xbf16>, vector<128x512xbf16>, vector<8x512xf32> -> vector<8x512xf32>
    %139 = arith.addf %136, %138 : vector<8x512xf32>
    %140 = vector.extract_strided_slice %139 {offsets = [0, 0], sizes = [8, 128], strides = [1, 1]} : vector<8x512xf32> to vector<8x128xf32>
    %141 = arith.negf %140 : vector<8x128xf32>
    %142 = math.exp %141 : vector<8x128xf32>
    %cst_53 = arith.constant 1.000000e+00 : f32
    %143 = vector.broadcast %cst_53 : f32 to vector<8x128xf32>
    %144 = arith.addf %143, %142 : vector<8x128xf32>
    %145 = arith.divf %143, %144 : vector<8x128xf32>
    %146 = vector.extract_strided_slice %139 {offsets = [0, 128], sizes = [8, 128], strides = [1, 1]} : vector<8x512xf32> to vector<8x128xf32>
    %147 = arith.negf %146 : vector<8x128xf32>
    %148 = math.exp %147 : vector<8x128xf32>
    %cst_54 = arith.constant 1.000000e+00 : f32
    %149 = vector.broadcast %cst_54 : f32 to vector<8x128xf32>
    %150 = arith.addf %149, %148 : vector<8x128xf32>
    %151 = arith.divf %149, %150 : vector<8x128xf32>
    %152 = vector.extract_strided_slice %139 {offsets = [0, 256], sizes = [8, 128], strides = [1, 1]} : vector<8x512xf32> to vector<8x128xf32>
    %153 = math.tanh %152 : vector<8x128xf32>
    %154 = vector.extract_strided_slice %139 {offsets = [0, 384], sizes = [8, 128], strides = [1, 1]} : vector<8x512xf32> to vector<8x128xf32>
    %155 = arith.negf %154 : vector<8x128xf32>
    %156 = math.exp %155 : vector<8x128xf32>
    %cst_55 = arith.constant 1.000000e+00 : f32
    %157 = vector.broadcast %cst_55 : f32 to vector<8x128xf32>
    %158 = arith.addf %157, %156 : vector<8x128xf32>
    %159 = arith.divf %157, %158 : vector<8x128xf32>
    %160 = arith.mulf %151, %121 : vector<8x128xf32>
    %161 = arith.mulf %145, %153 : vector<8x128xf32>
    %162 = arith.addf %160, %161 : vector<8x128xf32>
    %163 = math.tanh %162 : vector<8x128xf32>
    %164 = arith.mulf %159, %163 : vector<8x128xf32>
    %165 = arith.truncf %164 : vector<8x128xf32> to vector<8x128xbf16>
    %c0_56 = arith.constant 0 : index
    %166 = arith.index_cast %132 : i32 to index
    %c0_57 = arith.constant 0 : index
    %c0_58 = arith.constant 0 : index
    %167 = vector.load %arg4[%c0_56, %166, %c0_57, %c0_58] : memref<1x8x8x128xbf16, #tpu.memory_space<vmem>>, vector<1x1x8x128xbf16>
    %168 = vector.shape_cast %167 : vector<1x1x8x128xbf16> to vector<8x128xbf16>
    %169 = vector.shape_cast %165 : vector<8x128xbf16> to vector<1x1x8x128xbf16>
    tpu.vector_store %arg4[%c0_56, %166, %c0_57, %c0_58], %169 {strides = array<i32>} : memref<1x8x8x128xbf16, #tpu.memory_space<vmem>>, vector<1x1x8x128xbf16>,
    %c4_i32 = arith.constant 4 : i32
    %c2_i32_59 = arith.constant 2 : i32
    %170 = arith.muli %c2_i32_59, %c4_i32 : i32
    %c7_i32_60 = arith.constant 7 : i32
    %171 = arith.subi %c7_i32_60, %170 : i32
    %172 = arith.muli %arg0, %171 : i32
    %173 = arith.addi %c4_i32, %172 : i32
    %c0_61 = arith.constant 0 : index
    %174 = arith.index_cast %173 : i32 to index
    %c0_62 = arith.constant 0 : index
    %c0_63 = arith.constant 0 : index
    %175 = vector.load %arg2[%c0_61, %174, %c0_62, %c0_63] : memref<1x8x8x512xbf16, #tpu.memory_space<vmem>>, vector<1x1x8x512xbf16>
    %176 = vector.shape_cast %175 : vector<1x1x8x512xbf16> to vector<8x512xbf16>
    %177 = arith.extf %176 : vector<8x512xbf16> to vector<8x512xf32>
    %c0_64 = arith.constant 0 : index
    %c0_65 = arith.constant 0 : index
    %178 = vector.load %arg5[%c0_64, %c0_65] : memref<128x512xbf16, #tpu.memory_space<vmem>>, vector<128x512xbf16>
    %cst_66 = arith.constant dense<0.000000e+00> : vector<8x512xf32>
    %179 = tpu.matmul %165, %178, %cst_66 {dimension_numbers = #tpu.dot_dimension_numbers<[1], [0], [0], [1], [0, 0, 1, 1], [], []>} : vector<8x128xbf16>, vector<128x512xbf16>, vector<8x512xf32> -> vector<8x512xf32>
    %180 = arith.addf %177, %179 : vector<8x512xf32>
    %181 = vector.extract_strided_slice %180 {offsets = [0, 0], sizes = [8, 128], strides = [1, 1]} : vector<8x512xf32> to vector<8x128xf32>
    %182 = arith.negf %181 : vector<8x128xf32>
    %183 = math.exp %182 : vector<8x128xf32>
    %cst_67 = arith.constant 1.000000e+00 : f32
    %184 = vector.broadcast %cst_67 : f32 to vector<8x128xf32>
    %185 = arith.addf %184, %183 : vector<8x128xf32>
    %186 = arith.divf %184, %185 : vector<8x128xf32>
    %187 = vector.extract_strided_slice %180 {offsets = [0, 128], sizes = [8, 128], strides = [1, 1]} : vector<8x512xf32> to vector<8x128xf32>
    %188 = arith.negf %187 : vector<8x128xf32>
    %189 = math.exp %188 : vector<8x128xf32>
    %cst_68 = arith.constant 1.000000e+00 : f32
    %190 = vector.broadcast %cst_68 : f32 to vector<8x128xf32>
    %191 = arith.addf %190, %189 : vector<8x128xf32>
    %192 = arith.divf %190, %191 : vector<8x128xf32>
    %193 = vector.extract_strided_slice %180 {offsets = [0, 256], sizes = [8, 128], strides = [1, 1]} : vector<8x512xf32> to vector<8x128xf32>
    %194 = math.tanh %193 : vector<8x128xf32>
    %195 = vector.extract_strided_slice %180 {offsets = [0, 384], sizes = [8, 128], strides = [1, 1]} : vector<8x512xf32> to vector<8x128xf32>
    %196 = arith.negf %195 : vector<8x128xf32>
    %197 = math.exp %196 : vector<8x128xf32>
    %cst_69 = arith.constant 1.000000e+00 : f32
    %198 = vector.broadcast %cst_69 : f32 to vector<8x128xf32>
    %199 = arith.addf %198, %197 : vector<8x128xf32>
    %200 = arith.divf %198, %199 : vector<8x128xf32>
    %201 = arith.mulf %192, %162 : vector<8x128xf32>
    %202 = arith.mulf %186, %194 : vector<8x128xf32>
    %203 = arith.addf %201, %202 : vector<8x128xf32>
    %204 = math.tanh %203 : vector<8x128xf32>
    %205 = arith.mulf %200, %204 : vector<8x128xf32>
    %206 = arith.truncf %205 : vector<8x128xf32> to vector<8x128xbf16>
    %c0_70 = arith.constant 0 : index
    %207 = arith.index_cast %173 : i32 to index
    %c0_71 = arith.constant 0 : index
    %c0_72 = arith.constant 0 : index
    %208 = vector.load %arg4[%c0_70, %207, %c0_71, %c0_72] : memref<1x8x8x128xbf16, #tpu.memory_space<vmem>>, vector<1x1x8x128xbf16>
    %209 = vector.shape_cast %208 : vector<1x1x8x128xbf16> to vector<8x128xbf16>
    %210 = vector.shape_cast %206 : vector<8x128xbf16> to vector<1x1x8x128xbf16>
    tpu.vector_store %arg4[%c0_70, %207, %c0_71, %c0_72], %210 {strides = array<i32>} : memref<1x8x8x128xbf16, #tpu.memory_space<vmem>>, vector<1x1x8x128xbf16>,
    %c5_i32 = arith.constant 5 : i32
    %c2_i32_73 = arith.constant 2 : i32
    %211 = arith.muli %c2_i32_73, %c5_i32 : i32
    %c7_i32_74 = arith.constant 7 : i32
    %212 = arith.subi %c7_i32_74, %211 : i32
    %213 = arith.muli %arg0, %212 : i32
    %214 = arith.addi %c5_i32, %213 : i32
    %c0_75 = arith.constant 0 : index
    %215 = arith.index_cast %214 : i32 to index
    %c0_76 = arith.constant 0 : index
    %c0_77 = arith.constant 0 : index
    %216 = vector.load %arg2[%c0_75, %215, %c0_76, %c0_77] : memref<1x8x8x512xbf16, #tpu.memory_space<vmem>>, vector<1x1x8x512xbf16>
    %217 = vector.shape_cast %216 : vector<1x1x8x512xbf16> to vector<8x512xbf16>
    %218 = arith.extf %217 : vector<8x512xbf16> to vector<8x512xf32>
    %c0_78 = arith.constant 0 : index
    %c0_79 = arith.constant 0 : index
    %219 = vector.load %arg5[%c0_78, %c0_79] : memref<128x512xbf16, #tpu.memory_space<vmem>>, vector<128x512xbf16>
    %cst_80 = arith.constant dense<0.000000e+00> : vector<8x512xf32>
    %220 = tpu.matmul %206, %219, %cst_80 {dimension_numbers = #tpu.dot_dimension_numbers<[1], [0], [0], [1], [0, 0, 1, 1], [], []>} : vector<8x128xbf16>, vector<128x512xbf16>, vector<8x512xf32> -> vector<8x512xf32>
    %221 = arith.addf %218, %220 : vector<8x512xf32>
    %222 = vector.extract_strided_slice %221 {offsets = [0, 0], sizes = [8, 128], strides = [1, 1]} : vector<8x512xf32> to vector<8x128xf32>
    %223 = arith.negf %222 : vector<8x128xf32>
    %224 = math.exp %223 : vector<8x128xf32>
    %cst_81 = arith.constant 1.000000e+00 : f32
    %225 = vector.broadcast %cst_81 : f32 to vector<8x128xf32>
    %226 = arith.addf %225, %224 : vector<8x128xf32>
    %227 = arith.divf %225, %226 : vector<8x128xf32>
    %228 = vector.extract_strided_slice %221 {offsets = [0, 128], sizes = [8, 128], strides = [1, 1]} : vector<8x512xf32> to vector<8x128xf32>
    %229 = arith.negf %228 : vector<8x128xf32>
    %230 = math.exp %229 : vector<8x128xf32>
    %cst_82 = arith.constant 1.000000e+00 : f32
    %231 = vector.broadcast %cst_82 : f32 to vector<8x128xf32>
    %232 = arith.addf %231, %230 : vector<8x128xf32>
    %233 = arith.divf %231, %232 : vector<8x128xf32>
    %234 = vector.extract_strided_slice %221 {offsets = [0, 256], sizes = [8, 128], strides = [1, 1]} : vector<8x512xf32> to vector<8x128xf32>
    %235 = math.tanh %234 : vector<8x128xf32>
    %236 = vector.extract_strided_slice %221 {offsets = [0, 384], sizes = [8, 128], strides = [1, 1]} : vector<8x512xf32> to vector<8x128xf32>
    %237 = arith.negf %236 : vector<8x128xf32>
    %238 = math.exp %237 : vector<8x128xf32>
    %cst_83 = arith.constant 1.000000e+00 : f32
    %239 = vector.broadcast %cst_83 : f32 to vector<8x128xf32>
    %240 = arith.addf %239, %238 : vector<8x128xf32>
    %241 = arith.divf %239, %240 : vector<8x128xf32>
    %242 = arith.mulf %233, %203 : vector<8x128xf32>
    %243 = arith.mulf %227, %235 : vector<8x128xf32>
    %244 = arith.addf %242, %243 : vector<8x128xf32>
    %245 = math.tanh %244 : vector<8x128xf32>
    %246 = arith.mulf %241, %245 : vector<8x128xf32>
    %247 = arith.truncf %246 : vector<8x128xf32> to vector<8x128xbf16>
    %c0_84 = arith.constant 0 : index
    %248 = arith.index_cast %214 : i32 to index
    %c0_85 = arith.constant 0 : index
    %c0_86 = arith.constant 0 : index
    %249 = vector.load %arg4[%c0_84, %248, %c0_85, %c0_86] : memref<1x8x8x128xbf16, #tpu.memory_space<vmem>>, vector<1x1x8x128xbf16>
    %250 = vector.shape_cast %249 : vector<1x1x8x128xbf16> to vector<8x128xbf16>
    %251 = vector.shape_cast %247 : vector<8x128xbf16> to vector<1x1x8x128xbf16>
    tpu.vector_store %arg4[%c0_84, %248, %c0_85, %c0_86], %251 {strides = array<i32>} : memref<1x8x8x128xbf16, #tpu.memory_space<vmem>>, vector<1x1x8x128xbf16>,
    %c6_i32 = arith.constant 6 : i32
    %c2_i32_87 = arith.constant 2 : i32
    %252 = arith.muli %c2_i32_87, %c6_i32 : i32
    %c7_i32_88 = arith.constant 7 : i32
    %253 = arith.subi %c7_i32_88, %252 : i32
    %254 = arith.muli %arg0, %253 : i32
    %255 = arith.addi %c6_i32, %254 : i32
    %c0_89 = arith.constant 0 : index
    %256 = arith.index_cast %255 : i32 to index
    %c0_90 = arith.constant 0 : index
    %c0_91 = arith.constant 0 : index
    %257 = vector.load %arg2[%c0_89, %256, %c0_90, %c0_91] : memref<1x8x8x512xbf16, #tpu.memory_space<vmem>>, vector<1x1x8x512xbf16>
    %258 = vector.shape_cast %257 : vector<1x1x8x512xbf16> to vector<8x512xbf16>
    %259 = arith.extf %258 : vector<8x512xbf16> to vector<8x512xf32>
    %c0_92 = arith.constant 0 : index
    %c0_93 = arith.constant 0 : index
    %260 = vector.load %arg5[%c0_92, %c0_93] : memref<128x512xbf16, #tpu.memory_space<vmem>>, vector<128x512xbf16>
    %cst_94 = arith.constant dense<0.000000e+00> : vector<8x512xf32>
    %261 = tpu.matmul %247, %260, %cst_94 {dimension_numbers = #tpu.dot_dimension_numbers<[1], [0], [0], [1], [0, 0, 1, 1], [], []>} : vector<8x128xbf16>, vector<128x512xbf16>, vector<8x512xf32> -> vector<8x512xf32>
    %262 = arith.addf %259, %261 : vector<8x512xf32>
    %263 = vector.extract_strided_slice %262 {offsets = [0, 0], sizes = [8, 128], strides = [1, 1]} : vector<8x512xf32> to vector<8x128xf32>
    %264 = arith.negf %263 : vector<8x128xf32>
    %265 = math.exp %264 : vector<8x128xf32>
    %cst_95 = arith.constant 1.000000e+00 : f32
    %266 = vector.broadcast %cst_95 : f32 to vector<8x128xf32>
    %267 = arith.addf %266, %265 : vector<8x128xf32>
    %268 = arith.divf %266, %267 : vector<8x128xf32>
    %269 = vector.extract_strided_slice %262 {offsets = [0, 128], sizes = [8, 128], strides = [1, 1]} : vector<8x512xf32> to vector<8x128xf32>
    %270 = arith.negf %269 : vector<8x128xf32>
    %271 = math.exp %270 : vector<8x128xf32>
    %cst_96 = arith.constant 1.000000e+00 : f32
    %272 = vector.broadcast %cst_96 : f32 to vector<8x128xf32>
    %273 = arith.addf %272, %271 : vector<8x128xf32>
    %274 = arith.divf %272, %273 : vector<8x128xf32>
    %275 = vector.extract_strided_slice %262 {offsets = [0, 256], sizes = [8, 128], strides = [1, 1]} : vector<8x512xf32> to vector<8x128xf32>
    %276 = math.tanh %275 : vector<8x128xf32>
    %277 = vector.extract_strided_slice %262 {offsets = [0, 384], sizes = [8, 128], strides = [1, 1]} : vector<8x512xf32> to vector<8x128xf32>
    %278 = arith.negf %277 : vector<8x128xf32>
    %279 = math.exp %278 : vector<8x128xf32>
    %cst_97 = arith.constant 1.000000e+00 : f32
    %280 = vector.broadcast %cst_97 : f32 to vector<8x128xf32>
    %281 = arith.addf %280, %279 : vector<8x128xf32>
    %282 = arith.divf %280, %281 : vector<8x128xf32>
    %283 = arith.mulf %274, %244 : vector<8x128xf32>
    %284 = arith.mulf %268, %276 : vector<8x128xf32>
    %285 = arith.addf %283, %284 : vector<8x128xf32>
    %286 = math.tanh %285 : vector<8x128xf32>
    %287 = arith.mulf %282, %286 : vector<8x128xf32>
    %288 = arith.truncf %287 : vector<8x128xf32> to vector<8x128xbf16>
    %c0_98 = arith.constant 0 : index
    %289 = arith.index_cast %255 : i32 to index
    %c0_99 = arith.constant 0 : index
    %c0_100 = arith.constant 0 : index
    %290 = vector.load %arg4[%c0_98, %289, %c0_99, %c0_100] : memref<1x8x8x128xbf16, #tpu.memory_space<vmem>>, vector<1x1x8x128xbf16>
    %291 = vector.shape_cast %290 : vector<1x1x8x128xbf16> to vector<8x128xbf16>
    %292 = vector.shape_cast %288 : vector<8x128xbf16> to vector<1x1x8x128xbf16>
    tpu.vector_store %arg4[%c0_98, %289, %c0_99, %c0_100], %292 {strides = array<i32>} : memref<1x8x8x128xbf16, #tpu.memory_space<vmem>>, vector<1x1x8x128xbf16>,
    %c7_i32_101 = arith.constant 7 : i32
    %c2_i32_102 = arith.constant 2 : i32
    %293 = arith.muli %c2_i32_102, %c7_i32_101 : i32
    %c7_i32_103 = arith.constant 7 : i32
    %294 = arith.subi %c7_i32_103, %293 : i32
    %295 = arith.muli %arg0, %294 : i32
    %296 = arith.addi %c7_i32_101, %295 : i32
    %c0_104 = arith.constant 0 : index
    %297 = arith.index_cast %296 : i32 to index
    %c0_105 = arith.constant 0 : index
    %c0_106 = arith.constant 0 : index
    %298 = vector.load %arg2[%c0_104, %297, %c0_105, %c0_106] : memref<1x8x8x512xbf16, #tpu.memory_space<vmem>>, vector<1x1x8x512xbf16>
    %299 = vector.shape_cast %298 : vector<1x1x8x512xbf16> to vector<8x512xbf16>
    %300 = arith.extf %299 : vector<8x512xbf16> to vector<8x512xf32>
    %c0_107 = arith.constant 0 : index
    %c0_108 = arith.constant 0 : index
    %301 = vector.load %arg5[%c0_107, %c0_108] : memref<128x512xbf16, #tpu.memory_space<vmem>>, vector<128x512xbf16>
    %cst_109 = arith.constant dense<0.000000e+00> : vector<8x512xf32>
    %302 = tpu.matmul %288, %301, %cst_109 {dimension_numbers = #tpu.dot_dimension_numbers<[1], [0], [0], [1], [0, 0, 1, 1], [], []>} : vector<8x128xbf16>, vector<128x512xbf16>, vector<8x512xf32> -> vector<8x512xf32>
    %303 = arith.addf %300, %302 : vector<8x512xf32>
    %304 = vector.extract_strided_slice %303 {offsets = [0, 0], sizes = [8, 128], strides = [1, 1]} : vector<8x512xf32> to vector<8x128xf32>
    %305 = arith.negf %304 : vector<8x128xf32>
    %306 = math.exp %305 : vector<8x128xf32>
    %cst_110 = arith.constant 1.000000e+00 : f32
    %307 = vector.broadcast %cst_110 : f32 to vector<8x128xf32>
    %308 = arith.addf %307, %306 : vector<8x128xf32>
    %309 = arith.divf %307, %308 : vector<8x128xf32>
    %310 = vector.extract_strided_slice %303 {offsets = [0, 128], sizes = [8, 128], strides = [1, 1]} : vector<8x512xf32> to vector<8x128xf32>
    %311 = arith.negf %310 : vector<8x128xf32>
    %312 = math.exp %311 : vector<8x128xf32>
    %cst_111 = arith.constant 1.000000e+00 : f32
    %313 = vector.broadcast %cst_111 : f32 to vector<8x128xf32>
    %314 = arith.addf %313, %312 : vector<8x128xf32>
    %315 = arith.divf %313, %314 : vector<8x128xf32>
    %316 = vector.extract_strided_slice %303 {offsets = [0, 256], sizes = [8, 128], strides = [1, 1]} : vector<8x512xf32> to vector<8x128xf32>
    %317 = math.tanh %316 : vector<8x128xf32>
    %318 = vector.extract_strided_slice %303 {offsets = [0, 384], sizes = [8, 128], strides = [1, 1]} : vector<8x512xf32> to vector<8x128xf32>
    %319 = arith.negf %318 : vector<8x128xf32>
    %320 = math.exp %319 : vector<8x128xf32>
    %cst_112 = arith.constant 1.000000e+00 : f32
    %321 = vector.broadcast %cst_112 : f32 to vector<8x128xf32>
    %322 = arith.addf %321, %320 : vector<8x128xf32>
    %323 = arith.divf %321, %322 : vector<8x128xf32>
    %324 = arith.mulf %315, %285 : vector<8x128xf32>
    %325 = arith.mulf %309, %317 : vector<8x128xf32>
    %326 = arith.addf %324, %325 : vector<8x128xf32>
    %327 = math.tanh %326 : vector<8x128xf32>
    %328 = arith.mulf %323, %327 : vector<8x128xf32>
    %329 = arith.truncf %328 : vector<8x128xf32> to vector<8x128xbf16>
    %c0_113 = arith.constant 0 : index
    %330 = arith.index_cast %296 : i32 to index
    %c0_114 = arith.constant 0 : index
    %c0_115 = arith.constant 0 : index
    %331 = vector.load %arg4[%c0_113, %330, %c0_114, %c0_115] : memref<1x8x8x128xbf16, #tpu.memory_space<vmem>>, vector<1x1x8x128xbf16>
    %332 = vector.shape_cast %331 : vector<1x1x8x128xbf16> to vector<8x128xbf16>
    %333 = vector.shape_cast %329 : vector<8x128xbf16> to vector<1x1x8x128xbf16>
    tpu.vector_store %arg4[%c0_113, %330, %c0_114, %c0_115], %333 {strides = array<i32>} : memref<1x8x8x128xbf16, #tpu.memory_space<vmem>>, vector<1x1x8x128xbf16>,
    %c8_i32 = arith.constant 8 : i32
    %334 = arith.extf %329 : vector<8x128xbf16> to vector<8x128xf32>
    %c0_116 = arith.constant 0 : index
    %c0_117 = arith.constant 0 : index
    %335 = vector.load %arg7[%c0_116, %c0_117] : memref<8x128xf32, #tpu.memory_space<vmem>>, vector<8x128xf32>
    tpu.vector_store %arg7[%c0_116, %c0_117], %334 {strides = array<i32>} : memref<8x128xf32, #tpu.memory_space<vmem>>, vector<8x128xf32>,
    %c0_118 = arith.constant 0 : index
    %c0_119 = arith.constant 0 : index
    %336 = vector.load %arg8[%c0_118, %c0_119] : memref<8x128xf32, #tpu.memory_space<vmem>>, vector<8x128xf32>
    tpu.vector_store %arg8[%c0_118, %c0_119], %326 {strides = array<i32>} : memref<8x128xf32, #tpu.memory_space<vmem>>, vector<8x128xf32>,
    return
  }
  func.func @transform_0(%arg0: i32, %arg1: i32) -> (i32, i32, i32, i32) {
    %c2_i32 = arith.constant 2 : i32
    %0 = arith.muli %c2_i32, %arg1 : i32
    %c0_i32 = arith.constant 0 : i32
    %1 = arith.subi %c0_i32, %0 : i32
    %2 = arith.muli %arg0, %1 : i32
    %3 = arith.addi %arg1, %2 : i32
    %c0_i32_0 = arith.constant 0 : i32
    %c0_i32_1 = arith.constant 0 : i32
    %c0_i32_2 = arith.constant 0 : i32
    return %arg0, %3, %c0_i32_0, %c0_i32_1 : i32, i32, i32, i32
  }
  func.func @transform_2(%arg0: i32, %arg1: i32) -> (i32, i32, i32, i32) {
    %c2_i32 = arith.constant 2 : i32
    %0 = arith.muli %c2_i32, %arg1 : i32
    %c0_i32 = arith.constant 0 : i32
    %1 = arith.subi %c0_i32, %0 : i32
    %2 = arith.muli %arg0, %1 : i32
    %3 = arith.addi %arg1, %2 : i32
    %c0_i32_0 = arith.constant 0 : i32
    %c0_i32_1 = arith.constant 0 : i32
    %c0_i32_2 = arith.constant 0 : i32
    return %arg0, %3, %c0_i32_0, %c0_i32_1 : i32, i32, i32, i32
  }
}

</mosaic_0001>

<llo_original>
// kernel: tpu_custom_call.1
$region0: #{tpu_custom_call.1}
  #allocation0 [shape = 'u32[]', space=smem, size = 0x4, offset = 0x4, fixed_abs, tag = 'smem constant byte address 0x4 - core index']
  #allocation1 [shape = 'u32[144,128]{1,0:T(1,128)}', space=vmem, size = 0x12000, scoped, tag = 'internal scratch']
  #allocation2 [shape = 'bf16[128,512]{1,0:T(16,128)(2,1)}', space=vmem, size = 0x20000, scoped, tag = 'scratch operand']
  #allocation3 [shape = 's32[1]{0}', space=sflag, size = 0x4, scoped, tag = 'scratch operand']
  #allocation4 [shape = 'f32[8,128]{1,0:T(8,128)}', space=vmem, size = 0x1000, scoped, tag = 'scratch operand']
  #allocation5 [shape = 'f32[8,128]{1,0:T(8,128)}', space=vmem, size = 0x1000, scoped, tag = 'scratch operand']
  #allocation10 [shape = 's32[]', space=sflag, size = 0x4, offset = 0, fixed_abs, tag = 'sflag constant byte address 0x0 - dummy sync flag']
  %s0 = inlined_call_operand.hbm [shape: bf16[2,8,8,512], index: 0, kind: input, shape index: {}]
  %s1 = inlined_call_operand.hbm [shape: bf16[2,128,512], index: 1, kind: input, shape index: {}]
  %s2 = inlined_call_operand.hbm [shape: bf16[2,8,8,128], index: 2, kind: output, shape index: {}]
  %s3 = sld [smem:[#allocation0]]
  $region45: #{tpu_custom_call.1} parent=0
    _
  %s5 = ssub.s32 1, %s3
  %s6 = scalar_select 0, %s5, %s3
  $region1: #{tpu_custom_call.1} parent=0
    #allocation6 [shape = 'u8[131072]{0}', space=vmem, size = 0x20000, scoped, tag = 'input window, operand 0']
    #allocation7 [shape = 's32[2]{0}', space=sflag, size = 0x8, scoped, tag = 'scoped memory for tpu_custom_call.1']
    #allocation8 [shape = 's32[2]{0}', space=sflag, size = 0x8, scoped, tag = 'scoped memory for tpu_custom_call.1']
    #allocation9 [shape = 'u8[32768]{0}', space=vmem, size = 0x8000, scoped, tag = 'output window, operand 0']
    %7 = vsyncpa [#allocation7], 0
    %s8 = scalar_lea.sflag [#allocation7], 1
    %9 = vsyncpa %s8, 0
    %10 = vsyncpa [#allocation8], 0
    %s11 = scalar_lea.sflag [#allocation8], 1
    %12 = vsyncpa %s11, 0
    loop: start=0, step=1, limit=4
    $region2: #{tpu_custom_call.1} parent=1 // loop_pre_header
      _
    $region3: #{tpu_custom_call.1} parent=1 // loop_header
      %s14 = sphi 0, %s18
      %p15 = scmp.ge.s32.totalorder %s14, 4
      %s21 = sphi 0, %s33
      %s22 = sphi 0, %s29
      %s23 = sphi 0, %s21
      %s24 = sphi 0, %s22
      %s25 = sphi 0, %s23
      %s26 = sphi 0, %s24
      %s46 = sphi 0, %s48
      %s49 = sphi 0, %s46
      %s50 = sphi 0, %s49
      %s66 = sphi 0, %s50
      %s82 = sphi 0, %s84
      %s85 = sphi 0, %s82
      %s86 = sphi 0, %s85
      %s102 = sphi 0, %s86
    $region4: #{tpu_custom_call.1} parent=1 // loop_header_branch
      %17 = sbr.rel (%p15) target = $region8
    $region5: #{tpu_custom_call.1} parent=1 // loop_body
      %s19 = ssub.s32 %s14, 1
      %s20 = ssub.s32 %s14, 2
      %s27 = sadd.s32 1, %s22
      %p28 = scmp.ge.s32.totalorder %s27, 1
      %s29 = scalar_select %p28, 0, %s27
      %s30 = sadd.s32 1, %s21
      %s31 = scalar_select %p28, %s30, %s21
      %p32 = scmp.ge.s32.totalorder %s31, 2
      %s33 = scalar_select %p32, 0, %s31
      %s34 = smul.u32 %s22, 2
      %s35 = ssub.s32 0, %s34
      %s36 = smul.u32 %s21, %s35
      %s37 = sadd.s32 %s22, %s36
      %s38 = smul.u32 %s29, 2
      %s39 = ssub.s32 0, %s38
      %s40 = smul.u32 %s33, %s39
      %s41 = sadd.s32 %s29, %s40
      %s42 = ssub.s32 %s21, %s33
      %s43 = ssub.s32 %s37, %s41
      %s44 = sor.u32 %s42, %s43
      %p45 = scmp.eq.s32.totalorder %s44, 0
      %s47 = sadd.s32 %s46, 1
      %s48 = scalar_select %p45, %s46, %s47
      %p51 = pneg %p45
      %p52 = scmp.eq.s32.totalorder %s14, 1
      %p53 = por %p51, %p52
      %p54 = scmp.ne.s32.totalorder %s46, %s49
      %p55 = scmp.eq.s32.totalorder %s14, 0
      %p56 = por %p54, %p55
      %p57 = scmp.ne.s32.totalorder %s46, %s49
      %p58 = scmp.eq.s32.totalorder %s19, 1
      %p59 = por %p57, %p58
      %p60 = scmp.ne.s32.totalorder %s49, %s50
      %p61 = scmp.eq.s32.totalorder %s19, 0
      %p62 = por %p60, %p61
      %p63 = scmp.ne.s32.totalorder %s49, %s50
      %p64 = scmp.eq.s32.totalorder %s20, 1
      %p65 = por %p63, %p64
      %p67 = scmp.ne.s32.totalorder %s50, %s66
      %p68 = scmp.eq.s32.totalorder %s20, 0
      %p69 = por %p67, %p68
      %s70 = smul.u32 %s22, 2
      %s71 = ssub.s32 0, %s70
      %s72 = smul.u32 %s21, %s71
      %s73 = sadd.s32 %s22, %s72
      %s74 = smul.u32 %s29, 2
      %s75 = ssub.s32 0, %s74
      %s76 = smul.u32 %s33, %s75
      %s77 = sadd.s32 %s29, %s76
      %s78 = ssub.s32 %s21, %s33
      %s79 = ssub.s32 %s73, %s77
      %s80 = sor.u32 %s78, %s79
      %p81 = scmp.eq.s32.totalorder %s80, 0
      %s83 = sadd.s32 %s82, 1
      %s84 = scalar_select %p81, %s82, %s83
      %p87 = pneg %p81
      %p88 = scmp.eq.s32.totalorder %s14, 1
      %p89 = por %p87, %p88
      %p90 = scmp.ne.s32.totalorder %s82, %s85
      %p91 = scmp.eq.s32.totalorder %s14, 0
      %p92 = por %p90, %p91
      %p93 = scmp.ne.s32.totalorder %s82, %s85
      %p94 = scmp.eq.s32.totalorder %s19, 1
      %p95 = por %p93, %p94
      %p96 = scmp.ne.s32.totalorder %s85, %s86
      %p97 = scmp.eq.s32.totalorder %s19, 0
      %p98 = por %p96, %p97
      %p99 = scmp.ne.s32.totalorder %s85, %s86
      %p100 = scmp.eq.s32.totalorder %s20, 1
      %p101 = por %p99, %p100
      %p103 = scmp.ne.s32.totalorder %s86, %s102
      %p104 = scmp.eq.s32.totalorder %s20, 0
      %p105 = por %p103, %p104
      %p106 = scmp.le.s32.totalorder 1, %s14
      %p107 = scmp.lt.s32.totalorder %s14, 3
      %p108 = pnand %p106, %p107
      %p109 = pneg %p108
      // Predicated region
      $region9: #{tpu_custom_call.1} parent=5 // pred_check
        _
      $region10: #{tpu_custom_call.1} parent=5 // pred_check_branch
        %111 = sbr.rel (%p108) target = $region12
      $region11: #{tpu_custom_call.1} parent=5 // pred_region
        %s112 = ssub.s32 %s14, 1
      $region12: #{tpu_custom_call.1} parent=5 // pred_fallthru
        _
      %p113 = scmp.lt.s32.totalorder %s14, 2
      // Predicated region
      $region13: #{tpu_custom_call.1} parent=5 // pred_check
        %p114 = pneg %p113
      $region14: #{tpu_custom_call.1} parent=5 // pred_check_branch
        %116 = sbr.rel (%p114) target = $region16
      $region15: #{tpu_custom_call.1} parent=5 // pred_region
        // Predicated region
        $region17: #{tpu_custom_call.1} parent=15 // pred_check
          %p117 = pneg %p56
        $region18: #{tpu_custom_call.1} parent=15 // pred_check_branch
          %119 = sbr.rel (%p117) target = $region20
        $region19: #{tpu_custom_call.1} parent=15 // pred_region
          %s120 = sand.u32 %s46, 1
          %s121 = scalar_lea.sflag [#allocation7], %s120
          %s122 = sand.u32 %s46, 1
          %s123 = smul.addr %s122, 128
          %s124 = scalar_lea.vmem [#allocation6], %s123
          %s125 = smul.u32 %s22, 2
          %s126 = ssub.s32 0, %s125
          %s127 = smul.u32 %s21, %s126
          %s128 = sadd.s32 %s22, %s127
          %s129 = smul.u32 8, %s128
          %s131 = ssub.s32 2048, 2048
          %132 = vsyncadd %s121, %s131
          %s133 = smul.addr %s129, 4
          %s134 = smul.addr %s21, 32
          %s135 = sadd.s32 %s133, %s134
          %s136 = smul.addr %s135, 64
          %s137 = scalar_lea.hbm %s0, %s136
          %s138 = sshll.u32 %s124, 4
          %s139 = int_to_ptr.vmem [resolvable:$true] %s138
          %144 = dma.hbm_to_vmem [thread:$0]  %s137, 2048, %s139, %s121, 256, 256, 16
        $region20: #{tpu_custom_call.1} parent=15 // pred_fallthru
          _
      $region16: #{tpu_custom_call.1} parent=5 // pred_fallthru
        _
      %p145 = scmp.le.s32.totalorder 1, %s14
      %p146 = scmp.lt.s32.totalorder %s14, 3
      %p147 = pnand %p145, %p146
      %p148 = pneg %p147
      // Predicated region
      $region21: #{tpu_custom_call.1} parent=5 // pred_check
        _
      $region22: #{tpu_custom_call.1} parent=5 // pred_check_branch
        %150 = sbr.rel (%p147) target = $region24
      $region23: #{tpu_custom_call.1} parent=5 // pred_region
        %s151 = ssub.s32 %s14, 1
        %s152 = sand.u32 %s49, 1
        %s153 = scalar_lea.sflag [#allocation7], %s152
        %s154 = sand.u32 %s49, 1
        %s155 = smul.addr %s154, 128
        %s156 = scalar_lea.vmem [#allocation6], %s155
        // Predicated region
        $region25: #{tpu_custom_call.1} parent=23 // pred_check
          %p157 = pneg %p62
        $region26: #{tpu_custom_call.1} parent=23 // pred_check_branch
          %159 = sbr.rel (%p157) target = $region28
        $region27: #{tpu_custom_call.1} parent=23 // pred_region
          %160 = dma.done %s153, 2048
        $region28: #{tpu_custom_call.1} parent=23 // pred_fallthru
          _
        %s161 = sand.u32 %s49, 1
        %s162 = scalar_lea.sflag [#allocation7], %s161
        %s163 = sand.u32 %s49, 1
        %s164 = smul.addr %s163, 128
        %s165 = scalar_lea.vmem [#allocation6], %s164
        %p166 = pneg %p62
        %p167 = pneg %p59
        %p168 = pneg %p98
        %p169 = pneg %p95
        %s170 = sand.u32 %s85, 1
        %s171 = scalar_lea.sflag [#allocation8], %s170
        %s172 = sand.u32 %s85, 1
        %s173 = smul.addr %s172, 32
        %s174 = scalar_lea.vmem [#allocation9], %s173
        %s175 = smul.u32 %s24, 2
        %s176 = ssub.s32 0, %s175
        %s177 = smul.u32 %s23, %s176
        %s178 = sadd.s32 %s24, %s177
        %s179 = smul.u32 8, %s178
        %s180 = smul.u32 %s24, 2
        %s181 = ssub.s32 0, %s180
        %s182 = smul.u32 %s23, %s181
        %s183 = sadd.s32 %s24, %s182
        %s184 = smul.u32 8, %s183
        %p186 = scmp.eq.s32.totalorder %s24, 0
        // Predicated region
        $region29: #{tpu_custom_call.1} parent=23 // pred_check
          %p187 = pneg %p186
        $region30: #{tpu_custom_call.1} parent=23 // pred_check_branch
          %189 = sbr.rel (%p187) target = $region32
        $region31: #{tpu_custom_call.1} parent=23 // pred_region
          #allocation11 [shape = 'u32[9]{0}', space=smem, size = 0x24, scoped, tag = 'DMA stride descriptor']
          %s190 = smul.u32 %s23, 64
          %s191 = smul.addr %s190, 64
          %s192 = scalar_lea.hbm %s1, %s191
          %s194 = sshll.u32 1, 14
          %s195 = sxor.u32 4294967295, %s194
          %s197 = sld [smem:[#allocation0]]
          %s198 = sadd.s32 2, %s197
          %s200 = sshll.u32 7, 26
          %s201 = sxor.u32 4294967295, %s200
          %s202 = sand.u32 0, %s201
          %s203 = sshll.u32 %s198, 26
          %s204 = sor.u32 %s202, %s203
          %s205 = sshll.u32 [#allocation2], 4
          %s206 = int_to_ptr.vmem [resolvable:$true] %s205
          %209 = sst [smem:[#allocation11]] 512
          %s210 = scalar_lea.smem [#allocation11], 1
          %211 = sst [smem:[%s210]] 512
          %s212 = scalar_lea.smem [#allocation11], 2
          %213 = sst [smem:[%s212]] 4
          %s214 = scalar_lea.smem [#allocation11], 3
          %215 = sst [smem:[%s214]] 64
          %s216 = scalar_lea.smem [#allocation11], 4
          %217 = sst [smem:[%s216]] 128
          %s218 = scalar_lea.smem [#allocation11], 5
          %219 = sst [smem:[%s218]] 2
          %s220 = scalar_lea.smem [#allocation11], 6
          %221 = sst [smem:[%s220]] 256
          %s222 = scalar_lea.smem [#allocation11], 7
          %223 = sst [smem:[%s222]] 64
          %s224 = scalar_lea.smem [#allocation11], 8
          %225 = sst [smem:[%s224]] 4
          %227 = dma.general %s192, 4096, %s206, [#allocation3], [#allocation10], [#allocation11], %s204, 0
          %s228 = smul.u32 4, 16
          %s229 = smul.u32 %s228, 4
          %s230 = sshll.u32 %s229, 4
          %231 = dma.done [#allocation3], %s230
          %232 = vst [vmem:[#allocation4] sm:$0xff] 0.0
          %233 = vst [vmem:[#allocation5] sm:$0xff] 0.0
        $region32: #{tpu_custom_call.1} parent=23 // pred_fallthru
          _
        %v234 = vld [vmem:[#allocation4] sm:$0xff]
        %v235 = vpack.c.bf16 %v234, %v234
        %v236 = vld [vmem:[#allocation5] sm:$0xff]
        %s237 = smul.u32 %s23, 7
        %s238 = smul.u32 %s237, 4
        %s239 = smul.addr %s238, 4
        %s240 = scalar_lea.vmem %s156, %s239 [#allocation6]
        %v241 = vld [vmem:[%s240] sm:$0xff]
        %v242 = vld [vmem:[%s240 + $0x8] sm:$0xff]
        %v243 = vunpack.c.l.bf16 %v241
        %v244 = vunpack.c.h.bf16 %v241
        %v245 = vunpack.c.l.bf16 %v242
        %v246 = vunpack.c.h.bf16 %v242
        %v247 = vld [vmem:[#allocation2] sm:$0xff]
        %v248 = vld [vmem:[#allocation2 + $0x8] sm:$0xff]
        %v249 = vld [vmem:[#allocation2 + $0x10] sm:$0xff]
        %v250 = vld [vmem:[#allocation2 + $0x18] sm:$0xff]
        %v251 = vld [vmem:[#allocation2 + $0x20] sm:$0xff]
        %v252 = vld [vmem:[#allocation2 + $0x28] sm:$0xff]
        %v253 = vld [vmem:[#allocation2 + $0x30] sm:$0xff]
        %v254 = vld [vmem:[#allocation2 + $0x38] sm:$0xff]
        %v255 = vld [vmem:[#allocation2 + $0x40] sm:$0xff]
        %v256 = vld [vmem:[#allocation2 + $0x48] sm:$0xff]
        %v257 = vld [vmem:[#allocation2 + $0x50] sm:$0xff]
        %v258 = vld [vmem:[#allocation2 + $0x58] sm:$0xff]
        %v259 = vld [vmem:[#allocation2 + $0x60] sm:$0xff]
        %v260 = vld [vmem:[#allocation2 + $0x68] sm:$0xff]
        %v261 = vld [vmem:[#allocation2 + $0x70] sm:$0xff]
        %v262 = vld [vmem:[#allocation2 + $0x78] sm:$0xff]
        %v263 = vld [vmem:[#allocation2 + $0x80] sm:$0xff]
        %v264 = vld [vmem:[#allocation2 + $0x88] sm:$0xff]
        %v265 = vld [vmem:[#allocation2 + $0x90] sm:$0xff]
        %v266 = vld [vmem:[#allocation2 + $0x98] sm:$0xff]
        %v267 = vld [vmem:[#allocation2 + $0xa0] sm:$0xff]
        %v268 = vld [vmem:[#allocation2 + $0xa8] sm:$0xff]
        %v269 = vld [vmem:[#allocation2 + $0xb0] sm:$0xff]
        %v270 = vld [vmem:[#allocation2 + $0xb8] sm:$0xff]
        %v271 = vld [vmem:[#allocation2 + $0xc0] sm:$0xff]
        %v272 = vld [vmem:[#allocation2 + $0xc8] sm:$0xff]
        %v273 = vld [vmem:[#allocation2 + $0xd0] sm:$0xff]
        %v274 = vld [vmem:[#allocation2 + $0xd8] sm:$0xff]
        %v275 = vld [vmem:[#allocation2 + $0xe0] sm:$0xff]
        %v276 = vld [vmem:[#allocation2 + $0xe8] sm:$0xff]
        %v277 = vld [vmem:[#allocation2 + $0xf0] sm:$0xff]
        %v278 = vld [vmem:[#allocation2 + $0xf8] sm:$0xff]
        %279 = vmatprep.subr.bf16.mxu0 %v248
        %280 = vmatpush1.bf16.msra.mxu0 %v247
        %281 = vmatprep.subr.bf16.mxu0 %v252
        %282 = vmatpush1.bf16.msra.mxu0 %v251
        %283 = vmatprep.subr.bf16.mxu0 %v256
        %284 = vmatpush1.bf16.msra.mxu0 %v255
        %285 = vmatprep.subr.bf16.mxu0 %v260
        %286 = vmatpush1.bf16.msra.mxu0 %v259
        %287 = vmatprep.subr.bf16.mxu0 %v264
        %288 = vmatpush1.bf16.msra.mxu0 %v263
        %289 = vmatprep.subr.bf16.mxu0 %v268
        %290 = vmatpush1.bf16.msra.mxu0 %v267
        %291 = vmatprep.subr.bf16.mxu0 %v272
        %292 = vmatpush1.bf16.msra.mxu0 %v271
        %293 = vmatprep.subr.bf16.mxu0 %v276
        %294 = vmatpush1.bf16.msra.mxu0 %v275
        %295 = vmatprep.subr.bf16.mxu0 0
        %296 = vmatpush1.bf16.msra.mxu0 0
        %297 = vmatprep.subr.bf16.mxu0 0
        %298 = vmatpush1.bf16.msra.mxu0 0
        %299 = vmatprep.subr.bf16.mxu0 0
        %300 = vmatpush1.bf16.msra.mxu0 0
        %301 = vmatprep.subr.bf16.mxu0 0
        %302 = vmatpush1.bf16.msra.mxu0 0
        %303 = vmatprep.subr.bf16.mxu0 0
        %304 = vmatpush1.bf16.msra.mxu0 0
        %305 = vmatprep.subr.bf16.mxu0 0
        %306 = vmatpush1.bf16.msra.mxu0 0
        %307 = vmatprep.subr.bf16.mxu0 0
        %308 = vmatpush1.bf16.msra.mxu0 0
        %309 = vmatprep.subr.bf16.mxu0 0
        %310 = vmatpush1.bf16.msra.mxu0 0
        %311 = vmatprep.mubr.bf16.mxu0 0
        %312 = vmatmul.mubr.bf16.gmra.mrb[0].mxu0 %v235
        %v313 = vpop.f32.mrb[0].mxu0
        %v314 = vadd.f32 0.0, %v313
        %v315 = vpop.f32.mrb[0].mxu0
        %v316 = vadd.f32 0.0, %v315
        %v317 = vpop.f32.mrb[0].mxu0
        %v318 = vpop.f32.mrb[0].mxu0
        %319 = vdwg.mxu0
        %320 = vmatprep.subr.bf16.mxu0 %v250
        %321 = vmatpush1.bf16.msra.mxu0 %v249
        %322 = vmatprep.subr.bf16.mxu0 %v254
        %323 = vmatpush1.bf16.msra.mxu0 %v253
        %324 = vmatprep.subr.bf16.mxu0 %v258
        %325 = vmatpush1.bf16.msra.mxu0 %v257
        %326 = vmatprep.subr.bf16.mxu0 %v262
        %327 = vmatpush1.bf16.msra.mxu0 %v261
        %328 = vmatprep.subr.bf16.mxu0 %v266
        %329 = vmatpush1.bf16.msra.mxu0 %v265
        %330 = vmatprep.subr.bf16.mxu0 %v270
        %331 = vmatpush1.bf16.msra.mxu0 %v269
        %332 = vmatprep.subr.bf16.mxu0 %v274
        %333 = vmatpush1.bf16.msra.mxu0 %v273
        %334 = vmatprep.subr.bf16.mxu0 %v278
        %335 = vmatpush1.bf16.msra.mxu0 %v277
        %336 = vmatprep.subr.bf16.mxu0 0
        %337 = vmatpush1.bf16.msra.mxu0 0
        %338 = vmatprep.subr.bf16.mxu0 0
        %339 = vmatpush1.bf16.msra.mxu0 0
        %340 = vmatprep.subr.bf16.mxu0 0
        %341 = vmatpush1.bf16.msra.mxu0 0
        %342 = vmatprep.subr.bf16.mxu0 0
        %343 = vmatpush1.bf16.msra.mxu0 0
        %344 = vmatprep.subr.bf16.mxu0 0
        %345 = vmatpush1.bf16.msra.mxu0 0
        %346 = vmatprep.subr.bf16.mxu0 0
        %347 = vmatpush1.bf16.msra.mxu0 0
        %348 = vmatprep.subr.bf16.mxu0 0
        %349 = vmatpush1.bf16.msra.mxu0 0
        %350 = vmatprep.subr.bf16.mxu0 0
        %351 = vmatpush1.bf16.msra.mxu0 0
        %352 = vmatprep.mubr.bf16.mxu0 0
        %353 = vmatmul.mubr.bf16.gmra.mrb[0].mxu0 %v235
        %v354 = vpop.f32.mrb[0].mxu0
        %v355 = vadd.f32 0.0, %v354
        %v356 = vpop.f32.mrb[0].mxu0
        %v357 = vadd.f32 0.0, %v356
        %v358 = vpop.f32.mrb[0].mxu0
        %v359 = vpop.f32.mrb[0].mxu0
        %360 = vdwg.mxu0
        %v361 = vadd.f32 %v243, %v314
        %v362 = vadd.f32 %v244, %v316
        %v363 = vadd.f32 %v245, %v355
        %v364 = vadd.f32 %v246, %v357
        %v365 = vxor.u32 %v361, 2147483648
        %v366 = vmul.f32 %v365, 1.442695
        %v367 = vpow.pop %v366
        %v368 = vadd.f32 %v367, 1.0
        %v369 = vrcp.pop %v368
        %v370 = vmul.f32 1.0, %v369
        %v371 = vxor.u32 %v362, 2147483648
        %v372 = vmul.f32 %v371, 1.442695
        %v373 = vpow.pop %v372
        %v374 = vadd.f32 %v373, 1.0
        %v375 = vrcp.pop %v374
        %v376 = vmul.f32 1.0, %v375
        %v377 = vtanh.pop %v363
        %v378 = vxor.u32 %v364, 2147483648
        %v379 = vmul.f32 %v378, 1.442695
        %v380 = vpow.pop %v379
        %v381 = vadd.f32 %v380, 1.0
        %v382 = vrcp.pop %v381
        %v383 = vmul.f32 1.0, %v382
        %v384 = vmul.f32 %v376, %v236
        %v385 = vmul.f32 %v370, %v377
        %v386 = vadd.f32 %v384, %v385
        %v387 = vtanh.pop %v386
        %v388 = vmul.f32 %v383, %v387
        %v389 = vpack.c.bf16 %v388, %v388
        %s390 = smul.addr %s237, 4
        %s391 = scalar_lea.vmem %s174, %s390 [#allocation9]
        %392 = vst [vmem:[%s391] sm:$0xf] %v389
        %s393 = smul.u32 %s23, 5
        %s394 = sadd.s32 %s393, 1
        %s395 = smul.u32 %s394, 4
        %s396 = smul.addr %s395, 4
        %s397 = scalar_lea.vmem %s156, %s396 [#allocation6]
        %v398 = vld [vmem:[%s397] sm:$0xff]
        %v399 = vld [vmem:[%s397 + $0x8] sm:$0xff]
        %v400 = vunpack.c.l.bf16 %v398
        %v401 = vunpack.c.h.bf16 %v398
        %v402 = vunpack.c.l.bf16 %v399
        %v403 = vunpack.c.h.bf16 %v399
        %v404 = vld [vmem:[#allocation2] sm:$0xff]
        %v405 = vld [vmem:[#allocation2 + $0x8] sm:$0xff]
        %v406 = vld [vmem:[#allocation2 + $0x10] sm:$0xff]
        %v407 = vld [vmem:[#allocation2 + $0x18] sm:$0xff]
        %v408 = vld [vmem:[#allocation2 + $0x20] sm:$0xff]
        %v409 = vld [vmem:[#allocation2 + $0x28] sm:$0xff]
        %v410 = vld [vmem:[#allocation2 + $0x30] sm:$0xff]
        %v411 = vld [vmem:[#allocation2 + $0x38] sm:$0xff]
        %v412 = vld [vmem:[#allocation2 + $0x40] sm:$0xff]
        %v413 = vld [vmem:[#allocation2 + $0x48] sm:$0xff]
        %v414 = vld [vmem:[#allocation2 + $0x50] sm:$0xff]
        %v415 = vld [vmem:[#allocation2 + $0x58] sm:$0xff]
        %v416 = vld [vmem:[#allocation2 + $0x60] sm:$0xff]
        %v417 = vld [vmem:[#allocation2 + $0x68] sm:$0xff]
        %v418 = vld [vmem:[#allocation2 + $0x70] sm:$0xff]
        %v419 = vld [vmem:[#allocation2 + $0x78] sm:$0xff]
        %v420 = vld [vmem:[#allocation2 + $0x80] sm:$0xff]
        %v421 = vld [vmem:[#allocation2 + $0x88] sm:$0xff]
        %v422 = vld [vmem:[#allocation2 + $0x90] sm:$0xff]
        %v423 = vld [vmem:[#allocation2 + $0x98] sm:$0xff]
        %v424 = vld [vmem:[#allocation2 + $0xa0] sm:$0xff]
        %v425 = vld [vmem:[#allocation2 + $0xa8] sm:$0xff]
        %v426 = vld [vmem:[#allocation2 + $0xb0] sm:$0xff]
        %v427 = vld [vmem:[#allocation2 + $0xb8] sm:$0xff]
        %v428 = vld [vmem:[#allocation2 + $0xc0] sm:$0xff]
        %v429 = vld [vmem:[#allocation2 + $0xc8] sm:$0xff]
        %v430 = vld [vmem:[#allocation2 + $0xd0] sm:$0xff]
        %v431 = vld [vmem:[#allocation2 + $0xd8] sm:$0xff]
        %v432 = vld [vmem:[#allocation2 + $0xe0] sm:$0xff]
        %v433 = vld [vmem:[#allocation2 + $0xe8] sm:$0xff]
        %v434 = vld [vmem:[#allocation2 + $0xf0] sm:$0xff]
        %v435 = vld [vmem:[#allocation2 + $0xf8] sm:$0xff]
        %436 = vmatprep.subr.bf16.mxu0 %v405
        %437 = vmatpush1.bf16.msra.mxu0 %v404
        %438 = vmatprep.subr.bf16.mxu0 %v409
        %439 = vmatpush1.bf16.msra.mxu0 %v408
        %440 = vmatprep.subr.bf16.mxu0 %v413
        %441 = vmatpush1.bf16.msra.mxu0 %v412
        %442 = vmatprep.subr.bf16.mxu0 %v417
        %443 = vmatpush1.bf16.msra.mxu0 %v416
        %444 = vmatprep.subr.bf16.mxu0 %v421
        %445 = vmatpush1.bf16.msra.mxu0 %v420
        %446 = vmatprep.subr.bf16.mxu0 %v425
        %447 = vmatpush1.bf16.msra.mxu0 %v424
        %448 = vmatprep.subr.bf16.mxu0 %v429
        %449 = vmatpush1.bf16.msra.mxu0 %v428
        %450 = vmatprep.subr.bf16.mxu0 %v433
        %451 = vmatpush1.bf16.msra.mxu0 %v432
        %452 = vmatprep.subr.bf16.mxu0 0
        %453 = vmatpush1.bf16.msra.mxu0 0
        %454 = vmatprep.subr.bf16.mxu0 0
        %455 = vmatpush1.bf16.msra.mxu0 0
        %456 = vmatprep.subr.bf16.mxu0 0
        %457 = vmatpush1.bf16.msra.mxu0 0
        %458 = vmatprep.subr.bf16.mxu0 0
        %459 = vmatpush1.bf16.msra.mxu0 0
        %460 = vmatprep.subr.bf16.mxu0 0
        %461 = vmatpush1.bf16.msra.mxu0 0
        %462 = vmatprep.subr.bf16.mxu0 0
        %463 = vmatpush1.bf16.msra.mxu0 0
        %464 = vmatprep.subr.bf16.mxu0 0
        %465 = vmatpush1.bf16.msra.mxu0 0
        %466 = vmatprep.subr.bf16.mxu0 0
        %467 = vmatpush1.bf16.msra.mxu0 0
        %468 = vmatprep.mubr.bf16.mxu0 0
        %469 = vmatmul.mubr.bf16.gmra.mrb[0].mxu0 %v389
        %v470 = vpop.f32.mrb[0].mxu0
        %v471 = vadd.f32 0.0, %v470
        %v472 = vpop.f32.mrb[0].mxu0
        %v473 = vadd.f32 0.0, %v472
        %v474 = vpop.f32.mrb[0].mxu0
        %v475 = vpop.f32.mrb[0].mxu0
        %476 = vdwg.mxu0
        %477 = vmatprep.subr.bf16.mxu0 %v407
        %478 = vmatpush1.bf16.msra.mxu0 %v406
        %479 = vmatprep.subr.bf16.mxu0 %v411
        %480 = vmatpush1.bf16.msra.mxu0 %v410
        %481 = vmatprep.subr.bf16.mxu0 %v415
        %482 = vmatpush1.bf16.msra.mxu0 %v414
        %483 = vmatprep.subr.bf16.mxu0 %v419
        %484 = vmatpush1.bf16.msra.mxu0 %v418
        %485 = vmatprep.subr.bf16.mxu0 %v423
        %486 = vmatpush1.bf16.msra.mxu0 %v422
        %487 = vmatprep.subr.bf16.mxu0 %v427
        %488 = vmatpush1.bf16.msra.mxu0 %v426
        %489 = vmatprep.subr.bf16.mxu0 %v431
        %490 = vmatpush1.bf16.msra.mxu0 %v430
        %491 = vmatprep.subr.bf16.mxu0 %v435
        %492 = vmatpush1.bf16.msra.mxu0 %v434
        %493 = vmatprep.subr.bf16.mxu0 0
        %494 = vmatpush1.bf16.msra.mxu0 0
        %495 = vmatprep.subr.bf16.mxu0 0
        %496 = vmatpush1.bf16.msra.mxu0 0
        %497 = vmatprep.subr.bf16.mxu0 0
        %498 = vmatpush1.bf16.msra.mxu0 0
        %499 = vmatprep.subr.bf16.mxu0 0
        %500 = vmatpush1.bf16.msra.mxu0 0
        %501 = vmatprep.subr.bf16.mxu0 0
        %502 = vmatpush1.bf16.msra.mxu0 0
        %503 = vmatprep.subr.bf16.mxu0 0
        %504 = vmatpush1.bf16.msra.mxu0 0
        %505 = vmatprep.subr.bf16.mxu0 0
        %506 = vmatpush1.bf16.msra.mxu0 0
        %507 = vmatprep.subr.bf16.mxu0 0
        %508 = vmatpush1.bf16.msra.mxu0 0
        %509 = vmatprep.mubr.bf16.mxu0 0
        %510 = vmatmul.mubr.bf16.gmra.mrb[0].mxu0 %v389
        %v511 = vpop.f32.mrb[0].mxu0
        %v512 = vadd.f32 0.0, %v511
        %v513 = vpop.f32.mrb[0].mxu0
        %v514 = vadd.f32 0.0, %v513
        %v515 = vpop.f32.mrb[0].mxu0
        %v516 = vpop.f32.mrb[0].mxu0
        %517 = vdwg.mxu0
        %v518 = vadd.f32 %v400, %v471
        %v519 = vadd.f32 %v401, %v473
        %v520 = vadd.f32 %v402, %v512
        %v521 = vadd.f32 %v403, %v514
        %v522 = vxor.u32 %v518, 2147483648
        %v523 = vmul.f32 %v522, 1.442695
        %v524 = vpow.pop %v523
        %v525 = vadd.f32 %v524, 1.0
        %v526 = vrcp.pop %v525
        %v527 = vmul.f32 1.0, %v526
        %v528 = vxor.u32 %v519, 2147483648
        %v529 = vmul.f32 %v528, 1.442695
        %v530 = vpow.pop %v529
        %v531 = vadd.f32 %v530, 1.0
        %v532 = vrcp.pop %v531
        %v533 = vmul.f32 1.0, %v532
        %v534 = vtanh.pop %v520
        %v535 = vxor.u32 %v521, 2147483648
        %v536 = vmul.f32 %v535, 1.442695
        %v537 = vpow.pop %v536
        %v538 = vadd.f32 %v537, 1.0
        %v539 = vrcp.pop %v538
        %v540 = vmul.f32 1.0, %v539
        %v541 = vmul.f32 %v533, %v386
        %v542 = vmul.f32 %v527, %v534
        %v543 = vadd.f32 %v541, %v542
        %v544 = vtanh.pop %v543
        %v545 = vmul.f32 %v540, %v544
        %v546 = vpack.c.bf16 %v545, %v545
        %s547 = smul.addr %s394, 4
        %s548 = scalar_lea.vmem %s174, %s547 [#allocation9]
        %549 = vst [vmem:[%s548] sm:$0xf] %v546
        %s550 = smul.u32 %s23, 3
        %s551 = sadd.s32 %s550, 2
        %s552 = smul.u32 %s551, 4
        %s553 = smul.addr %s552, 4
        %s554 = scalar_lea.vmem %s156, %s553 [#allocation6]
        %v555 = vld [vmem:[%s554] sm:$0xff]
        %v556 = vld [vmem:[%s554 + $0x8] sm:$0xff]
        %v557 = vunpack.c.l.bf16 %v555
        %v558 = vunpack.c.h.bf16 %v555
        %v559 = vunpack.c.l.bf16 %v556
        %v560 = vunpack.c.h.bf16 %v556
        %v561 = vld [vmem:[#allocation2] sm:$0xff]
        %v562 = vld [vmem:[#allocation2 + $0x8] sm:$0xff]
        %v563 = vld [vmem:[#allocation2 + $0x10] sm:$0xff]
        %v564 = vld [vmem:[#allocation2 + $0x18] sm:$0xff]
        %v565 = vld [vmem:[#allocation2 + $0x20] sm:$0xff]
        %v566 = vld [vmem:[#allocation2 + $0x28] sm:$0xff]
        %v567 = vld [vmem:[#allocation2 + $0x30] sm:$0xff]
        %v568 = vld [vmem:[#allocation2 + $0x38] sm:$0xff]
        %v569 = vld [vmem:[#allocation2 + $0x40] sm:$0xff]
        %v570 = vld [vmem:[#allocation2 + $0x48] sm:$0xff]
        %v571 = vld [vmem:[#allocation2 + $0x50] sm:$0xff]
        %v572 = vld [vmem:[#allocation2 + $0x58] sm:$0xff]
        %v573 = vld [vmem:[#allocation2 + $0x60] sm:$0xff]
        %v574 = vld [vmem:[#allocation2 + $0x68] sm:$0xff]
        %v575 = vld [vmem:[#allocation2 + $0x70] sm:$0xff]
        %v576 = vld [vmem:[#allocation2 + $0x78] sm:$0xff]
        %v577 = vld [vmem:[#allocation2 + $0x80] sm:$0xff]
        %v578 = vld [vmem:[#allocation2 + $0x88] sm:$0xff]
        %v579 = vld [vmem:[#allocation2 + $0x90] sm:$0xff]
        %v580 = vld [vmem:[#allocation2 + $0x98] sm:$0xff]
        %v581 = vld [vmem:[#allocation2 + $0xa0] sm:$0xff]
        %v582 = vld [vmem:[#allocation2 + $0xa8] sm:$0xff]
        %v583 = vld [vmem:[#allocation2 + $0xb0] sm:$0xff]
        %v584 = vld [vmem:[#allocation2 + $0xb8] sm:$0xff]
        %v585 = vld [vmem:[#allocation2 + $0xc0] sm:$0xff]
        %v586 = vld [vmem:[#allocation2 + $0xc8] sm:$0xff]
        %v587 = vld [vmem:[#allocation2 + $0xd0] sm:$0xff]
        %v588 = vld [vmem:[#allocation2 + $0xd8] sm:$0xff]
        %v589 = vld [vmem:[#allocation2 + $0xe0] sm:$0xff]
        %v590 = vld [vmem:[#allocation2 + $0xe8] sm:$0xff]
        %v591 = vld [vmem:[#allocation2 + $0xf0] sm:$0xff]
        %v592 = vld [vmem:[#allocation2 + $0xf8] sm:$0xff]
        %593 = vmatprep.subr.bf16.mxu0 %v562
        %594 = vmatpush1.bf16.msra.mxu0 %v561
        %595 = vmatprep.subr.bf16.mxu0 %v566
        %596 = vmatpush1.bf16.msra.mxu0 %v565
        %597 = vmatprep.subr.bf16.mxu0 %v570
        %598 = vmatpush1.bf16.msra.mxu0 %v569
        %599 = vmatprep.subr.bf16.mxu0 %v574
        %600 = vmatpush1.bf16.msra.mxu0 %v573
        %601 = vmatprep.subr.bf16.mxu0 %v578
        %602 = vmatpush1.bf16.msra.mxu0 %v577
        %603 = vmatprep.subr.bf16.mxu0 %v582
        %604 = vmatpush1.bf16.msra.mxu0 %v581
        %605 = vmatprep.subr.bf16.mxu0 %v586
        %606 = vmatpush1.bf16.msra.mxu0 %v585
        %607 = vmatprep.subr.bf16.mxu0 %v590
        %608 = vmatpush1.bf16.msra.mxu0 %v589
        %609 = vmatprep.subr.bf16.mxu0 0
        %610 = vmatpush1.bf16.msra.mxu0 0
        %611 = vmatprep.subr.bf16.mxu0 0
        %612 = vmatpush1.bf16.msra.mxu0 0
        %613 = vmatprep.subr.bf16.mxu0 0
        %614 = vmatpush1.bf16.msra.mxu0 0
        %615 = vmatprep.subr.bf16.mxu0 0
        %616 = vmatpush1.bf16.msra.mxu0 0
        %617 = vmatprep.subr.bf16.mxu0 0
        %618 = vmatpush1.bf16.msra.mxu0 0
        %619 = vmatprep.subr.bf16.mxu0 0
        %620 = vmatpush1.bf16.msra.mxu0 0
        %621 = vmatprep.subr.bf16.mxu0 0
        %622 = vmatpush1.bf16.msra.mxu0 0
        %623 = vmatprep.subr.bf16.mxu0 0
        %624 = vmatpush1.bf16.msra.mxu0 0
        %625 = vmatprep.mubr.bf16.mxu0 0
        %626 = vmatmul.mubr.bf16.gmra.mrb[0].mxu0 %v546
        %v627 = vpop.f32.mrb[0].mxu0
        %v628 = vadd.f32 0.0, %v627
        %v629 = vpop.f32.mrb[0].mxu0
        %v630 = vadd.f32 0.0, %v629
        %v631 = vpop.f32.mrb[0].mxu0
        %v632 = vpop.f32.mrb[0].mxu0
        %633 = vdwg.mxu0
        %634 = vmatprep.subr.bf16.mxu0 %v564
        %635 = vmatpush1.bf16.msra.mxu0 %v563
        %636 = vmatprep.subr.bf16.mxu0 %v568
        %637 = vmatpush1.bf16.msra.mxu0 %v567
        %638 = vmatprep.subr.bf16.mxu0 %v572
        %639 = vmatpush1.bf16.msra.mxu0 %v571
        %640 = vmatprep.subr.bf16.mxu0 %v576
        %641 = vmatpush1.bf16.msra.mxu0 %v575
        %642 = vmatprep.subr.bf16.mxu0 %v580
        %643 = vmatpush1.bf16.msra.mxu0 %v579
        %644 = vmatprep.subr.bf16.mxu0 %v584
        %645 = vmatpush1.bf16.msra.mxu0 %v583
        %646 = vmatprep.subr.bf16.mxu0 %v588
        %647 = vmatpush1.bf16.msra.mxu0 %v587
        %648 = vmatprep.subr.bf16.mxu0 %v592
        %649 = vmatpush1.bf16.msra.mxu0 %v591
        %650 = vmatprep.subr.bf16.mxu0 0
        %651 = vmatpush1.bf16.msra.mxu0 0
        %652 = vmatprep.subr.bf16.mxu0 0
        %653 = vmatpush1.bf16.msra.mxu0 0
        %654 = vmatprep.subr.bf16.mxu0 0
        %655 = vmatpush1.bf16.msra.mxu0 0
        %656 = vmatprep.subr.bf16.mxu0 0
        %657 = vmatpush1.bf16.msra.mxu0 0
        %658 = vmatprep.subr.bf16.mxu0 0
        %659 = vmatpush1.bf16.msra.mxu0 0
        %660 = vmatprep.subr.bf16.mxu0 0
        %661 = vmatpush1.bf16.msra.mxu0 0
        %662 = vmatprep.subr.bf16.mxu0 0
        %663 = vmatpush1.bf16.msra.mxu0 0
        %664 = vmatprep.subr.bf16.mxu0 0
        %665 = vmatpush1.bf16.msra.mxu0 0
        %666 = vmatprep.mubr.bf16.mxu0 0
        %667 = vmatmul.mubr.bf16.gmra.mrb[0].mxu0 %v546
        %v668 = vpop.f32.mrb[0].mxu0
        %v669 = vadd.f32 0.0, %v668
        %v670 = vpop.f32.mrb[0].mxu0
        %v671 = vadd.f32 0.0, %v670
        %v672 = vpop.f32.mrb[0].mxu0
        %v673 = vpop.f32.mrb[0].mxu0
        %674 = vdwg.mxu0
        %v675 = vadd.f32 %v557, %v628
        %v676 = vadd.f32 %v558, %v630
        %v677 = vadd.f32 %v559, %v669
        %v678 = vadd.f32 %v560, %v671
        %v679 = vxor.u32 %v675, 2147483648
        %v680 = vmul.f32 %v679, 1.442695
        %v681 = vpow.pop %v680
        %v682 = vadd.f32 %v681, 1.0
        %v683 = vrcp.pop %v682
        %v684 = vmul.f32 1.0, %v683
        %v685 = vxor.u32 %v676, 2147483648
        %v686 = vmul.f32 %v685, 1.442695
        %v687 = vpow.pop %v686
        %v688 = vadd.f32 %v687, 1.0
        %v689 = vrcp.pop %v688
        %v690 = vmul.f32 1.0, %v689
        %v691 = vtanh.pop %v677
        %v692 = vxor.u32 %v678, 2147483648
        %v693 = vmul.f32 %v692, 1.442695
        %v694 = vpow.pop %v693
        %v695 = vadd.f32 %v694, 1.0
        %v696 = vrcp.pop %v695
        %v697 = vmul.f32 1.0, %v696
        %v698 = vmul.f32 %v690, %v543
        %v699 = vmul.f32 %v684, %v691
        %v700 = vadd.f32 %v698, %v699
        %v701 = vtanh.pop %v700
        %v702 = vmul.f32 %v697, %v701
        %v703 = vpack.c.bf16 %v702, %v702
        %s704 = smul.addr %s551, 4
        %s705 = scalar_lea.vmem %s174, %s704 [#allocation9]
        %706 = vst [vmem:[%s705] sm:$0xf] %v703
        %s707 = sadd.s32 %s23, 3
        %s708 = smul.u32 %s707, 4
        %s709 = smul.addr %s708, 4
        %s710 = scalar_lea.vmem %s156, %s709 [#allocation6]
        %v711 = vld [vmem:[%s710] sm:$0xff]
        %v712 = vld [vmem:[%s710 + $0x8] sm:$0xff]
        %v713 = vunpack.c.l.bf16 %v711
        %v714 = vunpack.c.h.bf16 %v711
        %v715 = vunpack.c.l.bf16 %v712
        %v716 = vunpack.c.h.bf16 %v712
        %v717 = vld [vmem:[#allocation2] sm:$0xff]
        %v718 = vld [vmem:[#allocation2 + $0x8] sm:$0xff]
        %v719 = vld [vmem:[#allocation2 + $0x10] sm:$0xff]
        %v720 = vld [vmem:[#allocation2 + $0x18] sm:$0xff]
        %v721 = vld [vmem:[#allocation2 + $0x20] sm:$0xff]
        %v722 = vld [vmem:[#allocation2 + $0x28] sm:$0xff]
        %v723 = vld [vmem:[#allocation2 + $0x30] sm:$0xff]
        %v724 = vld [vmem:[#allocation2 + $0x38] sm:$0xff]
        %v725 = vld [vmem:[#allocation2 + $0x40] sm:$0xff]
        %v726 = vld [vmem:[#allocation2 + $0x48] sm:$0xff]
        %v727 = vld [vmem:[#allocation2 + $0x50] sm:$0xff]
        %v728 = vld [vmem:[#allocation2 + $0x58] sm:$0xff]
        %v729 = vld [vmem:[#allocation2 + $0x60] sm:$0xff]
        %v730 = vld [vmem:[#allocation2 + $0x68] sm:$0xff]
        %v731 = vld [vmem:[#allocation2 + $0x70] sm:$0xff]
        %v732 = vld [vmem:[#allocation2 + $0x78] sm:$0xff]
        %v733 = vld [vmem:[#allocation2 + $0x80] sm:$0xff]
        %v734 = vld [vmem:[#allocation2 + $0x88] sm:$0xff]
        %v735 = vld [vmem:[#allocation2 + $0x90] sm:$0xff]
        %v736 = vld [vmem:[#allocation2 + $0x98] sm:$0xff]
        %v737 = vld [vmem:[#allocation2 + $0xa0] sm:$0xff]
        %v738 = vld [vmem:[#allocation2 + $0xa8] sm:$0xff]
        %v739 = vld [vmem:[#allocation2 + $0xb0] sm:$0xff]
        %v740 = vld [vmem:[#allocation2 + $0xb8] sm:$0xff]
        %v741 = vld [vmem:[#allocation2 + $0xc0] sm:$0xff]
        %v742 = vld [vmem:[#allocation2 + $0xc8] sm:$0xff]
        %v743 = vld [vmem:[#allocation2 + $0xd0] sm:$0xff]
        %v744 = vld [vmem:[#allocation2 + $0xd8] sm:$0xff]
        %v745 = vld [vmem:[#allocation2 + $0xe0] sm:$0xff]
        %v746 = vld [vmem:[#allocation2 + $0xe8] sm:$0xff]
        %v747 = vld [vmem:[#allocation2 + $0xf0] sm:$0xff]
        %v748 = vld [vmem:[#allocation2 + $0xf8] sm:$0xff]
        %749 = vmatprep.subr.bf16.mxu0 %v718
        %750 = vmatpush1.bf16.msra.mxu0 %v717
        %751 = vmatprep.subr.bf16.mxu0 %v722
        %752 = vmatpush1.bf16.msra.mxu0 %v721
        %753 = vmatprep.subr.bf16.mxu0 %v726
        %754 = vmatpush1.bf16.msra.mxu0 %v725
        %755 = vmatprep.subr.bf16.mxu0 %v730
        %756 = vmatpush1.bf16.msra.mxu0 %v729
        %757 = vmatprep.subr.bf16.mxu0 %v734
        %758 = vmatpush1.bf16.msra.mxu0 %v733
        %759 = vmatprep.subr.bf16.mxu0 %v738
        %760 = vmatpush1.bf16.msra.mxu0 %v737
        %761 = vmatprep.subr.bf16.mxu0 %v742
        %762 = vmatpush1.bf16.msra.mxu0 %v741
        %763 = vmatprep.subr.bf16.mxu0 %v746
        %764 = vmatpush1.bf16.msra.mxu0 %v745
        %765 = vmatprep.subr.bf16.mxu0 0
        %766 = vmatpush1.bf16.msra.mxu0 0
        %767 = vmatprep.subr.bf16.mxu0 0
        %768 = vmatpush1.bf16.msra.mxu0 0
        %769 = vmatprep.subr.bf16.mxu0 0
        %770 = vmatpush1.bf16.msra.mxu0 0
        %771 = vmatprep.subr.bf16.mxu0 0
        %772 = vmatpush1.bf16.msra.mxu0 0
        %773 = vmatprep.subr.bf16.mxu0 0
        %774 = vmatpush1.bf16.msra.mxu0 0
        %775 = vmatprep.subr.bf16.mxu0 0
        %776 = vmatpush1.bf16.msra.mxu0 0
        %777 = vmatprep.subr.bf16.mxu0 0
        %778 = vmatpush1.bf16.msra.mxu0 0
        %779 = vmatprep.subr.bf16.mxu0 0
        %780 = vmatpush1.bf16.msra.mxu0 0
        %781 = vmatprep.mubr.bf16.mxu0 0
        %782 = vmatmul.mubr.bf16.gmra.mrb[0].mxu0 %v703
        %v783 = vpop.f32.mrb[0].mxu0
        %v784 = vadd.f32 0.0, %v783
        %v785 = vpop.f32.mrb[0].mxu0
        %v786 = vadd.f32 0.0, %v785
        %v787 = vpop.f32.mrb[0].mxu0
        %v788 = vpop.f32.mrb[0].mxu0
        %789 = vdwg.mxu0
        %790 = vmatprep.subr.bf16.mxu0 %v720
        %791 = vmatpush1.bf16.msra.mxu0 %v719
        %792 = vmatprep.subr.bf16.mxu0 %v724
        %793 = vmatpush1.bf16.msra.mxu0 %v723
        %794 = vmatprep.subr.bf16.mxu0 %v728
        %795 = vmatpush1.bf16.msra.mxu0 %v727
        %796 = vmatprep.subr.bf16.mxu0 %v732
        %797 = vmatpush1.bf16.msra.mxu0 %v731
        %798 = vmatprep.subr.bf16.mxu0 %v736
        %799 = vmatpush1.bf16.msra.mxu0 %v735
        %800 = vmatprep.subr.bf16.mxu0 %v740
        %801 = vmatpush1.bf16.msra.mxu0 %v739
        %802 = vmatprep.subr.bf16.mxu0 %v744
        %803 = vmatpush1.bf16.msra.mxu0 %v743
        %804 = vmatprep.subr.bf16.mxu0 %v748
        %805 = vmatpush1.bf16.msra.mxu0 %v747
        %806 = vmatprep.subr.bf16.mxu0 0
        %807 = vmatpush1.bf16.msra.mxu0 0
        %808 = vmatprep.subr.bf16.mxu0 0
        %809 = vmatpush1.bf16.msra.mxu0 0
        %810 = vmatprep.subr.bf16.mxu0 0
        %811 = vmatpush1.bf16.msra.mxu0 0
        %812 = vmatprep.subr.bf16.mxu0 0
        %813 = vmatpush1.bf16.msra.mxu0 0
        %814 = vmatprep.subr.bf16.mxu0 0
        %815 = vmatpush1.bf16.msra.mxu0 0
        %816 = vmatprep.subr.bf16.mxu0 0
        %817 = vmatpush1.bf16.msra.mxu0 0
        %818 = vmatprep.subr.bf16.mxu0 0
        %819 = vmatpush1.bf16.msra.mxu0 0
        %820 = vmatprep.subr.bf16.mxu0 0
        %821 = vmatpush1.bf16.msra.mxu0 0
        %822 = vmatprep.mubr.bf16.mxu0 0
        %823 = vmatmul.mubr.bf16.gmra.mrb[0].mxu0 %v703
        %v824 = vpop.f32.mrb[0].mxu0
        %v825 = vadd.f32 0.0, %v824
        %v826 = vpop.f32.mrb[0].mxu0
        %v827 = vadd.f32 0.0, %v826
        %v828 = vpop.f32.mrb[0].mxu0
        %v829 = vpop.f32.mrb[0].mxu0
        %830 = vdwg.mxu0
        %v831 = vadd.f32 %v713, %v784
        %v832 = vadd.f32 %v714, %v786
        %v833 = vadd.f32 %v715, %v825
        %v834 = vadd.f32 %v716, %v827
        %v835 = vxor.u32 %v831, 2147483648
        %v836 = vmul.f32 %v835, 1.442695
        %v837 = vpow.pop %v836
        %v838 = vadd.f32 %v837, 1.0
        %v839 = vrcp.pop %v838
        %v840 = vmul.f32 1.0, %v839
        %v841 = vxor.u32 %v832, 2147483648
        %v842 = vmul.f32 %v841, 1.442695
        %v843 = vpow.pop %v842
        %v844 = vadd.f32 %v843, 1.0
        %v845 = vrcp.pop %v844
        %v846 = vmul.f32 1.0, %v845
        %v847 = vtanh.pop %v833
        %v848 = vxor.u32 %v834, 2147483648
        %v849 = vmul.f32 %v848, 1.442695
        %v850 = vpow.pop %v849
        %v851 = vadd.f32 %v850, 1.0
        %v852 = vrcp.pop %v851
        %v853 = vmul.f32 1.0, %v852
        %v854 = vmul.f32 %v846, %v700
        %v855 = vmul.f32 %v840, %v847
        %v856 = vadd.f32 %v854, %v855
        %v857 = vtanh.pop %v856
        %v858 = vmul.f32 %v853, %v857
        %v859 = vpack.c.bf16 %v858, %v858
        %s860 = smul.addr %s707, 4
        %s861 = scalar_lea.vmem %s174, %s860 [#allocation9]
        %862 = vst [vmem:[%s861] sm:$0xf] %v859
        %s863 = ssub.s32 4, %s23
        %s864 = smul.u32 %s863, 4
        %s865 = smul.addr %s864, 4
        %s866 = scalar_lea.vmem %s156, %s865 [#allocation6]
        %v867 = vld [vmem:[%s866] sm:$0xff]
        %v868 = vld [vmem:[%s866 + $0x8] sm:$0xff]
        %v869 = vunpack.c.l.bf16 %v867
        %v870 = vunpack.c.h.bf16 %v867
        %v871 = vunpack.c.l.bf16 %v868
        %v872 = vunpack.c.h.bf16 %v868
        %v873 = vld [vmem:[#allocation2] sm:$0xff]
        %v874 = vld [vmem:[#allocation2 + $0x8] sm:$0xff]
        %v875 = vld [vmem:[#allocation2 + $0x10] sm:$0xff]
        %v876 = vld [vmem:[#allocation2 + $0x18] sm:$0xff]
        %v877 = vld [vmem:[#allocation2 + $0x20] sm:$0xff]
        %v878 = vld [vmem:[#allocation2 + $0x28] sm:$0xff]
        %v879 = vld [vmem:[#allocation2 + $0x30] sm:$0xff]
        %v880 = vld [vmem:[#allocation2 + $0x38] sm:$0xff]
        %v881 = vld [vmem:[#allocation2 + $0x40] sm:$0xff]
        %v882 = vld [vmem:[#allocation2 + $0x48] sm:$0xff]
        %v883 = vld [vmem:[#allocation2 + $0x50] sm:$0xff]
        %v884 = vld [vmem:[#allocation2 + $0x58] sm:$0xff]
        %v885 = vld [vmem:[#allocation2 + $0x60] sm:$0xff]
        %v886 = vld [vmem:[#allocation2 + $0x68] sm:$0xff]
        %v887 = vld [vmem:[#allocation2 + $0x70] sm:$0xff]
        %v888 = vld [vmem:[#allocation2 + $0x78] sm:$0xff]
        %v889 = vld [vmem:[#allocation2 + $0x80] sm:$0xff]
        %v890 = vld [vmem:[#allocation2 + $0x88] sm:$0xff]
        %v891 = vld [vmem:[#allocation2 + $0x90] sm:$0xff]
        %v892 = vld [vmem:[#allocation2 + $0x98] sm:$0xff]
        %v893 = vld [vmem:[#allocation2 + $0xa0] sm:$0xff]
        %v894 = vld [vmem:[#allocation2 + $0xa8] sm:$0xff]
        %v895 = vld [vmem:[#allocation2 + $0xb0] sm:$0xff]
        %v896 = vld [vmem:[#allocation2 + $0xb8] sm:$0xff]
        %v897 = vld [vmem:[#allocation2 + $0xc0] sm:$0xff]
        %v898 = vld [vmem:[#allocation2 + $0xc8] sm:$0xff]
        %v899 = vld [vmem:[#allocation2 + $0xd0] sm:$0xff]
        %v900 = vld [vmem:[#allocation2 + $0xd8] sm:$0xff]
        %v901 = vld [vmem:[#allocation2 + $0xe0] sm:$0xff]
        %v902 = vld [vmem:[#allocation2 + $0xe8] sm:$0xff]
        %v903 = vld [vmem:[#allocation2 + $0xf0] sm:$0xff]
        %v904 = vld [vmem:[#allocation2 + $0xf8] sm:$0xff]
        %905 = vmatprep.subr.bf16.mxu0 %v874
        %906 = vmatpush1.bf16.msra.mxu0 %v873
        %907 = vmatprep.subr.bf16.mxu0 %v878
        %908 = vmatpush1.bf16.msra.mxu0 %v877
        %909 = vmatprep.subr.bf16.mxu0 %v882
        %910 = vmatpush1.bf16.msra.mxu0 %v881
        %911 = vmatprep.subr.bf16.mxu0 %v886
        %912 = vmatpush1.bf16.msra.mxu0 %v885
        %913 = vmatprep.subr.bf16.mxu0 %v890
        %914 = vmatpush1.bf16.msra.mxu0 %v889
        %915 = vmatprep.subr.bf16.mxu0 %v894
        %916 = vmatpush1.bf16.msra.mxu0 %v893
        %917 = vmatprep.subr.bf16.mxu0 %v898
        %918 = vmatpush1.bf16.msra.mxu0 %v897
        %919 = vmatprep.subr.bf16.mxu0 %v902
        %920 = vmatpush1.bf16.msra.mxu0 %v901
        %921 = vmatprep.subr.bf16.mxu0 0
        %922 = vmatpush1.bf16.msra.mxu0 0
        %923 = vmatprep.subr.bf16.mxu0 0
        %924 = vmatpush1.bf16.msra.mxu0 0
        %925 = vmatprep.subr.bf16.mxu0 0
        %926 = vmatpush1.bf16.msra.mxu0 0
        %927 = vmatprep.subr.bf16.mxu0 0
        %928 = vmatpush1.bf16.msra.mxu0 0
        %929 = vmatprep.subr.bf16.mxu0 0
        %930 = vmatpush1.bf16.msra.mxu0 0
        %931 = vmatprep.subr.bf16.mxu0 0
        %932 = vmatpush1.bf16.msra.mxu0 0
        %933 = vmatprep.subr.bf16.mxu0 0
        %934 = vmatpush1.bf16.msra.mxu0 0
        %935 = vmatprep.subr.bf16.mxu0 0
        %936 = vmatpush1.bf16.msra.mxu0 0
        %937 = vmatprep.mubr.bf16.mxu0 0
        %938 = vmatmul.mubr.bf16.gmra.mrb[0].mxu0 %v859
        %v939 = vpop.f32.mrb[0].mxu0
        %v940 = vadd.f32 0.0, %v939
        %v941 = vpop.f32.mrb[0].mxu0
        %v942 = vadd.f32 0.0, %v941
        %v943 = vpop.f32.mrb[0].mxu0
        %v944 = vpop.f32.mrb[0].mxu0
        %945 = vdwg.mxu0
        %946 = vmatprep.subr.bf16.mxu0 %v876
        %947 = vmatpush1.bf16.msra.mxu0 %v875
        %948 = vmatprep.subr.bf16.mxu0 %v880
        %949 = vmatpush1.bf16.msra.mxu0 %v879
        %950 = vmatprep.subr.bf16.mxu0 %v884
        %951 = vmatpush1.bf16.msra.mxu0 %v883
        %952 = vmatprep.subr.bf16.mxu0 %v888
        %953 = vmatpush1.bf16.msra.mxu0 %v887
        %954 = vmatprep.subr.bf16.mxu0 %v892
        %955 = vmatpush1.bf16.msra.mxu0 %v891
        %956 = vmatprep.subr.bf16.mxu0 %v896
        %957 = vmatpush1.bf16.msra.mxu0 %v895
        %958 = vmatprep.subr.bf16.mxu0 %v900
        %959 = vmatpush1.bf16.msra.mxu0 %v899
        %960 = vmatprep.subr.bf16.mxu0 %v904
        %961 = vmatpush1.bf16.msra.mxu0 %v903
        %962 = vmatprep.subr.bf16.mxu0 0
        %963 = vmatpush1.bf16.msra.mxu0 0
        %964 = vmatprep.subr.bf16.mxu0 0
        %965 = vmatpush1.bf16.msra.mxu0 0
        %966 = vmatprep.subr.bf16.mxu0 0
        %967 = vmatpush1.bf16.msra.mxu0 0
        %968 = vmatprep.subr.bf16.mxu0 0
        %969 = vmatpush1.bf16.msra.mxu0 0
        %970 = vmatprep.subr.bf16.mxu0 0
        %971 = vmatpush1.bf16.msra.mxu0 0
        %972 = vmatprep.subr.bf16.mxu0 0
        %973 = vmatpush1.bf16.msra.mxu0 0
        %974 = vmatprep.subr.bf16.mxu0 0
        %975 = vmatpush1.bf16.msra.mxu0 0
        %976 = vmatprep.subr.bf16.mxu0 0
        %977 = vmatpush1.bf16.msra.mxu0 0
        %978 = vmatprep.mubr.bf16.mxu0 0
        %979 = vmatmul.mubr.bf16.gmra.mrb[0].mxu0 %v859
        %v980 = vpop.f32.mrb[0].mxu0
        %v981 = vadd.f32 0.0, %v980
        %v982 = vpop.f32.mrb[0].mxu0
        %v983 = vadd.f32 0.0, %v982
        %v984 = vpop.f32.mrb[0].mxu0
        %v985 = vpop.f32.mrb[0].mxu0
        %986 = vdwg.mxu0
        %v987 = vadd.f32 %v869, %v940
        %v988 = vadd.f32 %v870, %v942
        %v989 = vadd.f32 %v871, %v981
        %v990 = vadd.f32 %v872, %v983
        %v991 = vxor.u32 %v987, 2147483648
        %v992 = vmul.f32 %v991, 1.442695
        %v993 = vpow.pop %v992
        %v994 = vadd.f32 %v993, 1.0
        %v995 = vrcp.pop %v994
        %v996 = vmul.f32 1.0, %v995
        %v997 = vxor.u32 %v988, 2147483648
        %v998 = vmul.f32 %v997, 1.442695
        %v999 = vpow.pop %v998
        %v1000 = vadd.f32 %v999, 1.0
        %v1001 = vrcp.pop %v1000
        %v1002 = vmul.f32 1.0, %v1001
        %v1003 = vtanh.pop %v989
        %v1004 = vxor.u32 %v990, 2147483648
        %v1005 = vmul.f32 %v1004, 1.442695
        %v1006 = vpow.pop %v1005
        %v1007 = vadd.f32 %v1006, 1.0
        %v1008 = vrcp.pop %v1007
        %v1009 = vmul.f32 1.0, %v1008
        %v1010 = vmul.f32 %v1002, %v856
        %v1011 = vmul.f32 %v996, %v1003
        %v1012 = vadd.f32 %v1010, %v1011
        %v1013 = vtanh.pop %v1012
        %v1014 = vmul.f32 %v1009, %v1013
        %v1015 = vpack.c.bf16 %v1014, %v1014
        %s1016 = smul.addr %s863, 4
        %s1017 = scalar_lea.vmem %s174, %s1016 [#allocation9]
        %1018 = vst [vmem:[%s1017] sm:$0xf] %v1015
        %s1019 = smul.u32 %s23, 4294967293
        %s1020 = sadd.s32 %s1019, 5
        %s1021 = smul.u32 %s1020, 4
        %s1022 = smul.addr %s1021, 4
        %s1023 = scalar_lea.vmem %s156, %s1022 [#allocation6]
        %v1024 = vld [vmem:[%s1023] sm:$0xff]
        %v1025 = vld [vmem:[%s1023 + $0x8] sm:$0xff]
        %v1026 = vunpack.c.l.bf16 %v1024
        %v1027 = vunpack.c.h.bf16 %v1024
        %v1028 = vunpack.c.l.bf16 %v1025
        %v1029 = vunpack.c.h.bf16 %v1025
        %v1030 = vld [vmem:[#allocation2] sm:$0xff]
        %v1031 = vld [vmem:[#allocation2 + $0x8] sm:$0xff]
        %v1032 = vld [vmem:[#allocation2 + $0x10] sm:$0xff]
        %v1033 = vld [vmem:[#allocation2 + $0x18] sm:$0xff]
        %v1034 = vld [vmem:[#allocation2 + $0x20] sm:$0xff]
        %v1035 = vld [vmem:[#allocation2 + $0x28] sm:$0xff]
        %v1036 = vld [vmem:[#allocation2 + $0x30] sm:$0xff]
        %v1037 = vld [vmem:[#allocation2 + $0x38] sm:$0xff]
        %v1038 = vld [vmem:[#allocation2 + $0x40] sm:$0xff]
        %v1039 = vld [vmem:[#allocation2 + $0x48] sm:$0xff]
        %v1040 = vld [vmem:[#allocation2 + $0x50] sm:$0xff]
        %v1041 = vld [vmem:[#allocation2 + $0x58] sm:$0xff]
        %v1042 = vld [vmem:[#allocation2 + $0x60] sm:$0xff]
        %v1043 = vld [vmem:[#allocation2 + $0x68] sm:$0xff]
        %v1044 = vld [vmem:[#allocation2 + $0x70] sm:$0xff]
        %v1045 = vld [vmem:[#allocation2 + $0x78] sm:$0xff]
        %v1046 = vld [vmem:[#allocation2 + $0x80] sm:$0xff]
        %v1047 = vld [vmem:[#allocation2 + $0x88] sm:$0xff]
        %v1048 = vld [vmem:[#allocation2 + $0x90] sm:$0xff]
        %v1049 = vld [vmem:[#allocation2 + $0x98] sm:$0xff]
        %v1050 = vld [vmem:[#allocation2 + $0xa0] sm:$0xff]
        %v1051 = vld [vmem:[#allocation2 + $0xa8] sm:$0xff]
        %v1052 = vld [vmem:[#allocation2 + $0xb0] sm:$0xff]
        %v1053 = vld [vmem:[#allocation2 + $0xb8] sm:$0xff]
        %v1054 = vld [vmem:[#allocation2 + $0xc0] sm:$0xff]
        %v1055 = vld [vmem:[#allocation2 + $0xc8] sm:$0xff]
        %v1056 = vld [vmem:[#allocation2 + $0xd0] sm:$0xff]
        %v1057 = vld [vmem:[#allocation2 + $0xd8] sm:$0xff]
        %v1058 = vld [vmem:[#allocation2 + $0xe0] sm:$0xff]
        %v1059 = vld [vmem:[#allocation2 + $0xe8] sm:$0xff]
        %v1060 = vld [vmem:[#allocation2 + $0xf0] sm:$0xff]
        %v1061 = vld [vmem:[#allocation2 + $0xf8] sm:$0xff]
        %1062 = vmatprep.subr.bf16.mxu0 %v1031
        %1063 = vmatpush1.bf16.msra.mxu0 %v1030
        %1064 = vmatprep.subr.bf16.mxu0 %v1035
        %1065 = vmatpush1.bf16.msra.mxu0 %v1034
        %1066 = vmatprep.subr.bf16.mxu0 %v1039
        %1067 = vmatpush1.bf16.msra.mxu0 %v1038
        %1068 = vmatprep.subr.bf16.mxu0 %v1043
        %1069 = vmatpush1.bf16.msra.mxu0 %v1042
        %1070 = vmatprep.subr.bf16.mxu0 %v1047
        %1071 = vmatpush1.bf16.msra.mxu0 %v1046
        %1072 = vmatprep.subr.bf16.mxu0 %v1051
        %1073 = vmatpush1.bf16.msra.mxu0 %v1050
        %1074 = vmatprep.subr.bf16.mxu0 %v1055
        %1075 = vmatpush1.bf16.msra.mxu0 %v1054
        %1076 = vmatprep.subr.bf16.mxu0 %v1059
        %1077 = vmatpush1.bf16.msra.mxu0 %v1058
        %1078 = vmatprep.subr.bf16.mxu0 0
        %1079 = vmatpush1.bf16.msra.mxu0 0
        %1080 = vmatprep.subr.bf16.mxu0 0
        %1081 = vmatpush1.bf16.msra.mxu0 0
        %1082 = vmatprep.subr.bf16.mxu0 0
        %1083 = vmatpush1.bf16.msra.mxu0 0
        %1084 = vmatprep.subr.bf16.mxu0 0
        %1085 = vmatpush1.bf16.msra.mxu0 0
        %1086 = vmatprep.subr.bf16.mxu0 0
        %1087 = vmatpush1.bf16.msra.mxu0 0
        %1088 = vmatprep.subr.bf16.mxu0 0
        %1089 = vmatpush1.bf16.msra.mxu0 0
        %1090 = vmatprep.subr.bf16.mxu0 0
        %1091 = vmatpush1.bf16.msra.mxu0 0
        %1092 = vmatprep.subr.bf16.mxu0 0
        %1093 = vmatpush1.bf16.msra.mxu0 0
        %1094 = vmatprep.mubr.bf16.mxu0 0
        %1095 = vmatmul.mubr.bf16.gmra.mrb[0].mxu0 %v1015
        %v1096 = vpop.f32.mrb[0].mxu0
        %v1097 = vadd.f32 0.0, %v1096
        %v1098 = vpop.f32.mrb[0].mxu0
        %v1099 = vadd.f32 0.0, %v1098
        %v1100 = vpop.f32.mrb[0].mxu0
        %v1101 = vpop.f32.mrb[0].mxu0
        %1102 = vdwg.mxu0
        %1103 = vmatprep.subr.bf16.mxu0 %v1033
        %1104 = vmatpush1.bf16.msra.mxu0 %v1032
        %1105 = vmatprep.subr.bf16.mxu0 %v1037
        %1106 = vmatpush1.bf16.msra.mxu0 %v1036
        %1107 = vmatprep.subr.bf16.mxu0 %v1041
        %1108 = vmatpush1.bf16.msra.mxu0 %v1040
        %1109 = vmatprep.subr.bf16.mxu0 %v1045
        %1110 = vmatpush1.bf16.msra.mxu0 %v1044
        %1111 = vmatprep.subr.bf16.mxu0 %v1049
        %1112 = vmatpush1.bf16.msra.mxu0 %v1048
        %1113 = vmatprep.subr.bf16.mxu0 %v1053
        %1114 = vmatpush1.bf16.msra.mxu0 %v1052
        %1115 = vmatprep.subr.bf16.mxu0 %v1057
        %1116 = vmatpush1.bf16.msra.mxu0 %v1056
        %1117 = vmatprep.subr.bf16.mxu0 %v1061
        %1118 = vmatpush1.bf16.msra.mxu0 %v1060
        %1119 = vmatprep.subr.bf16.mxu0 0
        %1120 = vmatpush1.bf16.msra.mxu0 0
        %1121 = vmatprep.subr.bf16.mxu0 0
        %1122 = vmatpush1.bf16.msra.mxu0 0
        %1123 = vmatprep.subr.bf16.mxu0 0
        %1124 = vmatpush1.bf16.msra.mxu0 0
        %1125 = vmatprep.subr.bf16.mxu0 0
        %1126 = vmatpush1.bf16.msra.mxu0 0
        %1127 = vmatprep.subr.bf16.mxu0 0
        %1128 = vmatpush1.bf16.msra.mxu0 0
        %1129 = vmatprep.subr.bf16.mxu0 0
        %1130 = vmatpush1.bf16.msra.mxu0 0
        %1131 = vmatprep.subr.bf16.mxu0 0
        %1132 = vmatpush1.bf16.msra.mxu0 0
        %1133 = vmatprep.subr.bf16.mxu0 0
        %1134 = vmatpush1.bf16.msra.mxu0 0
        %1135 = vmatprep.mubr.bf16.mxu0 0
        %1136 = vmatmul.mubr.bf16.gmra.mrb[0].mxu0 %v1015
        %v1137 = vpop.f32.mrb[0].mxu0
        %v1138 = vadd.f32 0.0, %v1137
        %v1139 = vpop.f32.mrb[0].mxu0
        %v1140 = vadd.f32 0.0, %v1139
        %v1141 = vpop.f32.mrb[0].mxu0
        %v1142 = vpop.f32.mrb[0].mxu0
        %1143 = vdwg.mxu0
        %v1144 = vadd.f32 %v1026, %v1097
        %v1145 = vadd.f32 %v1027, %v1099
        %v1146 = vadd.f32 %v1028, %v1138
        %v1147 = vadd.f32 %v1029, %v1140
        %v1148 = vxor.u32 %v1144, 2147483648
        %v1149 = vmul.f32 %v1148, 1.442695
        %v1150 = vpow.pop %v1149
        %v1151 = vadd.f32 %v1150, 1.0
        %v1152 = vrcp.pop %v1151
        %v1153 = vmul.f32 1.0, %v1152
        %v1154 = vxor.u32 %v1145, 2147483648
        %v1155 = vmul.f32 %v1154, 1.442695
        %v1156 = vpow.pop %v1155
        %v1157 = vadd.f32 %v1156, 1.0
        %v1158 = vrcp.pop %v1157
        %v1159 = vmul.f32 1.0, %v1158
        %v1160 = vtanh.pop %v1146
        %v1161 = vxor.u32 %v1147, 2147483648
        %v1162 = vmul.f32 %v1161, 1.442695
        %v1163 = vpow.pop %v1162
        %v1164 = vadd.f32 %v1163, 1.0
        %v1165 = vrcp.pop %v1164
        %v1166 = vmul.f32 1.0, %v1165
        %v1167 = vmul.f32 %v1159, %v1012
        %v1168 = vmul.f32 %v1153, %v1160
        %v1169 = vadd.f32 %v1167, %v1168
        %v1170 = vtanh.pop %v1169
        %v1171 = vmul.f32 %v1166, %v1170
        %v1172 = vpack.c.bf16 %v1171, %v1171
        %s1173 = smul.addr %s1020, 4
        %s1174 = scalar_lea.vmem %s174, %s1173 [#allocation9]
        %1175 = vst [vmem:[%s1174] sm:$0xf] %v1172
        %s1176 = smul.u32 %s23, 4294967291
        %s1177 = sadd.s32 %s1176, 6
        %s1178 = smul.u32 %s1177, 4
        %s1179 = smul.addr %s1178, 4
        %s1180 = scalar_lea.vmem %s156, %s1179 [#allocation6]
        %v1181 = vld [vmem:[%s1180] sm:$0xff]
        %v1182 = vld [vmem:[%s1180 + $0x8] sm:$0xff]
        %v1183 = vunpack.c.l.bf16 %v1181
        %v1184 = vunpack.c.h.bf16 %v1181
        %v1185 = vunpack.c.l.bf16 %v1182
        %v1186 = vunpack.c.h.bf16 %v1182
        %v1187 = vld [vmem:[#allocation2] sm:$0xff]
        %v1188 = vld [vmem:[#allocation2 + $0x8] sm:$0xff]
        %v1189 = vld [vmem:[#allocation2 + $0x10] sm:$0xff]
        %v1190 = vld [vmem:[#allocation2 + $0x18] sm:$0xff]
        %v1191 = vld [vmem:[#allocation2 + $0x20] sm:$0xff]
        %v1192 = vld [vmem:[#allocation2 + $0x28] sm:$0xff]
        %v1193 = vld [vmem:[#allocation2 + $0x30] sm:$0xff]
        %v1194 = vld [vmem:[#allocation2 + $0x38] sm:$0xff]
        %v1195 = vld [vmem:[#allocation2 + $0x40] sm:$0xff]
        %v1196 = vld [vmem:[#allocation2 + $0x48] sm:$0xff]
        %v1197 = vld [vmem:[#allocation2 + $0x50] sm:$0xff]
        %v1198 = vld [vmem:[#allocation2 + $0x58] sm:$0xff]
        %v1199 = vld [vmem:[#allocation2 + $0x60] sm:$0xff]
        %v1200 = vld [vmem:[#allocation2 + $0x68] sm:$0xff]
        %v1201 = vld [vmem:[#allocation2 + $0x70] sm:$0xff]
        %v1202 = vld [vmem:[#allocation2 + $0x78] sm:$0xff]
        %v1203 = vld [vmem:[#allocation2 + $0x80] sm:$0xff]
        %v1204 = vld [vmem:[#allocation2 + $0x88] sm:$0xff]
        %v1205 = vld [vmem:[#allocation2 + $0x90] sm:$0xff]
        %v1206 = vld [vmem:[#allocation2 + $0x98] sm:$0xff]
        %v1207 = vld [vmem:[#allocation2 + $0xa0] sm:$0xff]
        %v1208 = vld [vmem:[#allocation2 + $0xa8] sm:$0xff]
        %v1209 = vld [vmem:[#allocation2 + $0xb0] sm:$0xff]
        %v1210 = vld [vmem:[#allocation2 + $0xb8] sm:$0xff]
        %v1211 = vld [vmem:[#allocation2 + $0xc0] sm:$0xff]
        %v1212 = vld [vmem:[#allocation2 + $0xc8] sm:$0xff]
        %v1213 = vld [vmem:[#allocation2 + $0xd0] sm:$0xff]
        %v1214 = vld [vmem:[#allocation2 + $0xd8] sm:$0xff]
        %v1215 = vld [vmem:[#allocation2 + $0xe0] sm:$0xff]
        %v1216 = vld [vmem:[#allocation2 + $0xe8] sm:$0xff]
        %v1217 = vld [vmem:[#allocation2 + $0xf0] sm:$0xff]
        %v1218 = vld [vmem:[#allocation2 + $0xf8] sm:$0xff]
        %1219 = vmatprep.subr.bf16.mxu0 %v1188
        %1220 = vmatpush1.bf16.msra.mxu0 %v1187
        %1221 = vmatprep.subr.bf16.mxu0 %v1192
        %1222 = vmatpush1.bf16.msra.mxu0 %v1191
        %1223 = vmatprep.subr.bf16.mxu0 %v1196
        %1224 = vmatpush1.bf16.msra.mxu0 %v1195
        %1225 = vmatprep.subr.bf16.mxu0 %v1200
        %1226 = vmatpush1.bf16.msra.mxu0 %v1199
        %1227 = vmatprep.subr.bf16.mxu0 %v1204
        %1228 = vmatpush1.bf16.msra.mxu0 %v1203
        %1229 = vmatprep.subr.bf16.mxu0 %v1208
        %1230 = vmatpush1.bf16.msra.mxu0 %v1207
        %1231 = vmatprep.subr.bf16.mxu0 %v1212
        %1232 = vmatpush1.bf16.msra.mxu0 %v1211
        %1233 = vmatprep.subr.bf16.mxu0 %v1216
        %1234 = vmatpush1.bf16.msra.mxu0 %v1215
        %1235 = vmatprep.subr.bf16.mxu0 0
        %1236 = vmatpush1.bf16.msra.mxu0 0
        %1237 = vmatprep.subr.bf16.mxu0 0
        %1238 = vmatpush1.bf16.msra.mxu0 0
        %1239 = vmatprep.subr.bf16.mxu0 0
        %1240 = vmatpush1.bf16.msra.mxu0 0
        %1241 = vmatprep.subr.bf16.mxu0 0
        %1242 = vmatpush1.bf16.msra.mxu0 0
        %1243 = vmatprep.subr.bf16.mxu0 0
        %1244 = vmatpush1.bf16.msra.mxu0 0
        %1245 = vmatprep.subr.bf16.mxu0 0
        %1246 = vmatpush1.bf16.msra.mxu0 0
        %1247 = vmatprep.subr.bf16.mxu0 0
        %1248 = vmatpush1.bf16.msra.mxu0 0
        %1249 = vmatprep.subr.bf16.mxu0 0
        %1250 = vmatpush1.bf16.msra.mxu0 0
        %1251 = vmatprep.mubr.bf16.mxu0 0
        %1252 = vmatmul.mubr.bf16.gmra.mrb[0].mxu0 %v1172
        %v1253 = vpop.f32.mrb[0].mxu0
        %v1254 = vadd.f32 0.0, %v1253
        %v1255 = vpop.f32.mrb[0].mxu0
        %v1256 = vadd.f32 0.0, %v1255
        %v1257 = vpop.f32.mrb[0].mxu0
        %v1258 = vpop.f32.mrb[0].mxu0
        %1259 = vdwg.mxu0
        %1260 = vmatprep.subr.bf16.mxu0 %v1190
        %1261 = vmatpush1.bf16.msra.mxu0 %v1189
        %1262 = vmatprep.subr.bf16.mxu0 %v1194
        %1263 = vmatpush1.bf16.msra.mxu0 %v1193
        %1264 = vmatprep.subr.bf16.mxu0 %v1198
        %1265 = vmatpush1.bf16.msra.mxu0 %v1197
        %1266 = vmatprep.subr.bf16.mxu0 %v1202
        %1267 = vmatpush1.bf16.msra.mxu0 %v1201
        %1268 = vmatprep.subr.bf16.mxu0 %v1206
        %1269 = vmatpush1.bf16.msra.mxu0 %v1205
        %1270 = vmatprep.subr.bf16.mxu0 %v1210
        %1271 = vmatpush1.bf16.msra.mxu0 %v1209
        %1272 = vmatprep.subr.bf16.mxu0 %v1214
        %1273 = vmatpush1.bf16.msra.mxu0 %v1213
        %1274 = vmatprep.subr.bf16.mxu0 %v1218
        %1275 = vmatpush1.bf16.msra.mxu0 %v1217
        %1276 = vmatprep.subr.bf16.mxu0 0
        %1277 = vmatpush1.bf16.msra.mxu0 0
        %1278 = vmatprep.subr.bf16.mxu0 0
        %1279 = vmatpush1.bf16.msra.mxu0 0
        %1280 = vmatprep.subr.bf16.mxu0 0
        %1281 = vmatpush1.bf16.msra.mxu0 0
        %1282 = vmatprep.subr.bf16.mxu0 0
        %1283 = vmatpush1.bf16.msra.mxu0 0
        %1284 = vmatprep.subr.bf16.mxu0 0
        %1285 = vmatpush1.bf16.msra.mxu0 0
        %1286 = vmatprep.subr.bf16.mxu0 0
        %1287 = vmatpush1.bf16.msra.mxu0 0
        %1288 = vmatprep.subr.bf16.mxu0 0
        %1289 = vmatpush1.bf16.msra.mxu0 0
        %1290 = vmatprep.subr.bf16.mxu0 0
        %1291 = vmatpush1.bf16.msra.mxu0 0
        %1292 = vmatprep.mubr.bf16.mxu0 0
        %1293 = vmatmul.mubr.bf16.gmra.mrb[0].mxu0 %v1172
        %v1294 = vpop.f32.mrb[0].mxu0
        %v1295 = vadd.f32 0.0, %v1294
        %v1296 = vpop.f32.mrb[0].mxu0
        %v1297 = vadd.f32 0.0, %v1296
        %v1298 = vpop.f32.mrb[0].mxu0
        %v1299 = vpop.f32.mrb[0].mxu0
        %1300 = vdwg.mxu0
        %v1301 = vadd.f32 %v1183, %v1254
        %v1302 = vadd.f32 %v1184, %v1256
        %v1303 = vadd.f32 %v1185, %v1295
        %v1304 = vadd.f32 %v1186, %v1297
        %v1305 = vxor.u32 %v1301, 2147483648
        %v1306 = vmul.f32 %v1305, 1.442695
        %v1307 = vpow.pop %v1306
        %v1308 = vadd.f32 %v1307, 1.0
        %v1309 = vrcp.pop %v1308
        %v1310 = vmul.f32 1.0, %v1309
        %v1311 = vxor.u32 %v1302, 2147483648
        %v1312 = vmul.f32 %v1311, 1.442695
        %v1313 = vpow.pop %v1312
        %v1314 = vadd.f32 %v1313, 1.0
        %v1315 = vrcp.pop %v1314
        %v1316 = vmul.f32 1.0, %v1315
        %v1317 = vtanh.pop %v1303
        %v1318 = vxor.u32 %v1304, 2147483648
        %v1319 = vmul.f32 %v1318, 1.442695
        %v1320 = vpow.pop %v1319
        %v1321 = vadd.f32 %v1320, 1.0
        %v1322 = vrcp.pop %v1321
        %v1323 = vmul.f32 1.0, %v1322
        %v1324 = vmul.f32 %v1316, %v1169
        %v1325 = vmul.f32 %v1310, %v1317
        %v1326 = vadd.f32 %v1324, %v1325
        %v1327 = vtanh.pop %v1326
        %v1328 = vmul.f32 %v1323, %v1327
        %v1329 = vpack.c.bf16 %v1328, %v1328
        %s1330 = smul.addr %s1177, 4
        %s1331 = scalar_lea.vmem %s174, %s1330 [#allocation9]
        %1332 = vst [vmem:[%s1331] sm:$0xf] %v1329
        %s1333 = smul.u32 %s23, 4294967289
        %s1334 = sadd.s32 %s1333, 7
        %s1335 = smul.u32 %s1334, 4
        %s1336 = smul.addr %s1335, 4
        %s1337 = scalar_lea.vmem %s156, %s1336 [#allocation6]
        %v1338 = vld [vmem:[%s1337] sm:$0xff]
        %v1339 = vld [vmem:[%s1337 + $0x8] sm:$0xff]
        %v1340 = vunpack.c.l.bf16 %v1338
        %v1341 = vunpack.c.h.bf16 %v1338
        %v1342 = vunpack.c.l.bf16 %v1339
        %v1343 = vunpack.c.h.bf16 %v1339
        %v1344 = vld [vmem:[#allocation2] sm:$0xff]
        %v1345 = vld [vmem:[#allocation2 + $0x8] sm:$0xff]
        %v1346 = vld [vmem:[#allocation2 + $0x10] sm:$0xff]
        %v1347 = vld [vmem:[#allocation2 + $0x18] sm:$0xff]
        %v1348 = vld [vmem:[#allocation2 + $0x20] sm:$0xff]
        %v1349 = vld [vmem:[#allocation2 + $0x28] sm:$0xff]
        %v1350 = vld [vmem:[#allocation2 + $0x30] sm:$0xff]
        %v1351 = vld [vmem:[#allocation2 + $0x38] sm:$0xff]
        %v1352 = vld [vmem:[#allocation2 + $0x40] sm:$0xff]
        %v1353 = vld [vmem:[#allocation2 + $0x48] sm:$0xff]
        %v1354 = vld [vmem:[#allocation2 + $0x50] sm:$0xff]
        %v1355 = vld [vmem:[#allocation2 + $0x58] sm:$0xff]
        %v1356 = vld [vmem:[#allocation2 + $0x60] sm:$0xff]
        %v1357 = vld [vmem:[#allocation2 + $0x68] sm:$0xff]
        %v1358 = vld [vmem:[#allocation2 + $0x70] sm:$0xff]
        %v1359 = vld [vmem:[#allocation2 + $0x78] sm:$0xff]
        %v1360 = vld [vmem:[#allocation2 + $0x80] sm:$0xff]
        %v1361 = vld [vmem:[#allocation2 + $0x88] sm:$0xff]
        %v1362 = vld [vmem:[#allocation2 + $0x90] sm:$0xff]
        %v1363 = vld [vmem:[#allocation2 + $0x98] sm:$0xff]
        %v1364 = vld [vmem:[#allocation2 + $0xa0] sm:$0xff]
        %v1365 = vld [vmem:[#allocation2 + $0xa8] sm:$0xff]
        %v1366 = vld [vmem:[#allocation2 + $0xb0] sm:$0xff]
        %v1367 = vld [vmem:[#allocation2 + $0xb8] sm:$0xff]
        %v1368 = vld [vmem:[#allocation2 + $0xc0] sm:$0xff]
        %v1369 = vld [vmem:[#allocation2 + $0xc8] sm:$0xff]
        %v1370 = vld [vmem:[#allocation2 + $0xd0] sm:$0xff]
        %v1371 = vld [vmem:[#allocation2 + $0xd8] sm:$0xff]
        %v1372 = vld [vmem:[#allocation2 + $0xe0] sm:$0xff]
        %v1373 = vld [vmem:[#allocation2 + $0xe8] sm:$0xff]
        %v1374 = vld [vmem:[#allocation2 + $0xf0] sm:$0xff]
        %v1375 = vld [vmem:[#allocation2 + $0xf8] sm:$0xff]
        %1376 = vmatprep.subr.bf16.mxu0 %v1345
        %1377 = vmatpush1.bf16.msra.mxu0 %v1344
        %1378 = vmatprep.subr.bf16.mxu0 %v1349
        %1379 = vmatpush1.bf16.msra.mxu0 %v1348
        %1380 = vmatprep.subr.bf16.mxu0 %v1353
        %1381 = vmatpush1.bf16.msra.mxu0 %v1352
        %1382 = vmatprep.subr.bf16.mxu0 %v1357
        %1383 = vmatpush1.bf16.msra.mxu0 %v1356
        %1384 = vmatprep.subr.bf16.mxu0 %v1361
        %1385 = vmatpush1.bf16.msra.mxu0 %v1360
        %1386 = vmatprep.subr.bf16.mxu0 %v1365
        %1387 = vmatpush1.bf16.msra.mxu0 %v1364
        %1388 = vmatprep.subr.bf16.mxu0 %v1369
        %1389 = vmatpush1.bf16.msra.mxu0 %v1368
        %1390 = vmatprep.subr.bf16.mxu0 %v1373
        %1391 = vmatpush1.bf16.msra.mxu0 %v1372
        %1392 = vmatprep.subr.bf16.mxu0 0
        %1393 = vmatpush1.bf16.msra.mxu0 0
        %1394 = vmatprep.subr.bf16.mxu0 0
        %1395 = vmatpush1.bf16.msra.mxu0 0
        %1396 = vmatprep.subr.bf16.mxu0 0
        %1397 = vmatpush1.bf16.msra.mxu0 0
        %1398 = vmatprep.subr.bf16.mxu0 0
        %1399 = vmatpush1.bf16.msra.mxu0 0
        %1400 = vmatprep.subr.bf16.mxu0 0
        %1401 = vmatpush1.bf16.msra.mxu0 0
        %1402 = vmatprep.subr.bf16.mxu0 0
        %1403 = vmatpush1.bf16.msra.mxu0 0
        %1404 = vmatprep.subr.bf16.mxu0 0
        %1405 = vmatpush1.bf16.msra.mxu0 0
        %1406 = vmatprep.subr.bf16.mxu0 0
        %1407 = vmatpush1.bf16.msra.mxu0 0
        %1408 = vmatprep.mubr.bf16.mxu0 0
        %1409 = vmatmul.mubr.bf16.gmra.mrb[0].mxu0 %v1329
        %v1410 = vpop.f32.mrb[0].mxu0
        %v1411 = vadd.f32 0.0, %v1410
        %v1412 = vpop.f32.mrb[0].mxu0
        %v1413 = vadd.f32 0.0, %v1412
        %v1414 = vpop.f32.mrb[0].mxu0
        %v1415 = vpop.f32.mrb[0].mxu0
        %1416 = vdwg.mxu0
        %1417 = vmatprep.subr.bf16.mxu0 %v1347
        %1418 = vmatpush1.bf16.msra.mxu0 %v1346
        %1419 = vmatprep.subr.bf16.mxu0 %v1351
        %1420 = vmatpush1.bf16.msra.mxu0 %v1350
        %1421 = vmatprep.subr.bf16.mxu0 %v1355
        %1422 = vmatpush1.bf16.msra.mxu0 %v1354
        %1423 = vmatprep.subr.bf16.mxu0 %v1359
        %1424 = vmatpush1.bf16.msra.mxu0 %v1358
        %1425 = vmatprep.subr.bf16.mxu0 %v1363
        %1426 = vmatpush1.bf16.msra.mxu0 %v1362
        %1427 = vmatprep.subr.bf16.mxu0 %v1367
        %1428 = vmatpush1.bf16.msra.mxu0 %v1366
        %1429 = vmatprep.subr.bf16.mxu0 %v1371
        %1430 = vmatpush1.bf16.msra.mxu0 %v1370
        %1431 = vmatprep.subr.bf16.mxu0 %v1375
        %1432 = vmatpush1.bf16.msra.mxu0 %v1374
        %1433 = vmatprep.subr.bf16.mxu0 0
        %1434 = vmatpush1.bf16.msra.mxu0 0
        %1435 = vmatprep.subr.bf16.mxu0 0
        %1436 = vmatpush1.bf16.msra.mxu0 0
        %1437 = vmatprep.subr.bf16.mxu0 0
        %1438 = vmatpush1.bf16.msra.mxu0 0
        %1439 = vmatprep.subr.bf16.mxu0 0
        %1440 = vmatpush1.bf16.msra.mxu0 0
        %1441 = vmatprep.subr.bf16.mxu0 0
        %1442 = vmatpush1.bf16.msra.mxu0 0
        %1443 = vmatprep.subr.bf16.mxu0 0
        %1444 = vmatpush1.bf16.msra.mxu0 0
        %1445 = vmatprep.subr.bf16.mxu0 0
        %1446 = vmatpush1.bf16.msra.mxu0 0
        %1447 = vmatprep.subr.bf16.mxu0 0
        %1448 = vmatpush1.bf16.msra.mxu0 0
        %1449 = vmatprep.mubr.bf16.mxu0 0
        %1450 = vmatmul.mubr.bf16.gmra.mrb[0].mxu0 %v1329
        %v1451 = vpop.f32.mrb[0].mxu0
        %v1452 = vadd.f32 0.0, %v1451
        %v1453 = vpop.f32.mrb[0].mxu0
        %v1454 = vadd.f32 0.0, %v1453
        %v1455 = vpop.f32.mrb[0].mxu0
        %v1456 = vpop.f32.mrb[0].mxu0
        %1457 = vdwg.mxu0
        %v1458 = vadd.f32 %v1340, %v1411
        %v1459 = vadd.f32 %v1341, %v1413
        %v1460 = vadd.f32 %v1342, %v1452
        %v1461 = vadd.f32 %v1343, %v1454
        %v1462 = vxor.u32 %v1458, 2147483648
        %v1463 = vmul.f32 %v1462, 1.442695
        %v1464 = vpow.pop %v1463
        %v1465 = vadd.f32 %v1464, 1.0
        %v1466 = vrcp.pop %v1465
        %v1467 = vmul.f32 1.0, %v1466
        %v1468 = vxor.u32 %v1459, 2147483648
        %v1469 = vmul.f32 %v1468, 1.442695
        %v1470 = vpow.pop %v1469
        %v1471 = vadd.f32 %v1470, 1.0
        %v1472 = vrcp.pop %v1471
        %v1473 = vmul.f32 1.0, %v1472
        %v1474 = vtanh.pop %v1460
        %v1475 = vxor.u32 %v1461, 2147483648
        %v1476 = vmul.f32 %v1475, 1.442695
        %v1477 = vpow.pop %v1476
        %v1478 = vadd.f32 %v1477, 1.0
        %v1479 = vrcp.pop %v1478
        %v1480 = vmul.f32 1.0, %v1479
        %v1481 = vmul.f32 %v1473, %v1326
        %v1482 = vmul.f32 %v1467, %v1474
        %v1483 = vadd.f32 %v1481, %v1482
        %v1484 = vtanh.pop %v1483
        %v1485 = vmul.f32 %v1480, %v1484
        %v1486 = vpack.c.bf16 %v1485, %v1485
        %s1487 = smul.addr %s1334, 4
        %s1488 = scalar_lea.vmem %s174, %s1487 [#allocation9]
        %1489 = vst [vmem:[%s1488] sm:$0xf] %v1486
        %v1490 = vunpack.c.l.bf16 %v1486
        %1491 = vst [vmem:[#allocation4] sm:$0xff] %v1490
        %1492 = vst [vmem:[#allocation5] sm:$0xff] %v1483
        %s1493 = sand.u32 %s85, 1
        %s1494 = scalar_lea.sflag [#allocation8], %s1493
        %s1495 = sand.u32 %s85, 1
        %s1496 = smul.addr %s1495, 32
        %s1497 = scalar_lea.vmem [#allocation9], %s1496
        // Predicated region
        $region33: #{tpu_custom_call.1} parent=23 // pred_check
          %p1498 = pneg %p95
        $region34: #{tpu_custom_call.1} parent=23 // pred_check_branch
          %1500 = sbr.rel (%p1498) target = $region36
        $region35: #{tpu_custom_call.1} parent=23 // pred_region
          %s1501 = smul.u32 %s24, 2
          %s1502 = ssub.s32 0, %s1501
          %s1503 = smul.u32 %s23, %s1502
          %s1504 = sadd.s32 %s24, %s1503
          %s1505 = smul.u32 8, %s1504
          %s1507 = ssub.s32 512, 512
          %1508 = vsyncadd %s1494, %s1507
          %s1509 = smul.addr %s23, 8
          %s1510 = sadd.s32 %s1505, %s1509
          %s1511 = smul.addr %s1510, 64
          %s1512 = scalar_lea.hbm %s2, %s1511
          %s1513 = sshll.u32 %s1497, 4
          %s1514 = int_to_ptr.vmem [resolvable:$true] %s1513
          %1519 = dma.vmem_to_hbm [thread:$0]  %s1514, 512, %s1512, %s1494, 64, 64, 4
        $region36: #{tpu_custom_call.1} parent=23 // pred_fallthru
          _
      $region24: #{tpu_custom_call.1} parent=5 // pred_fallthru
        _
      %p1520 = scmp.le.s32.totalorder 2, %s14
      // Predicated region
      $region37: #{tpu_custom_call.1} parent=5 // pred_check
        %p1521 = pneg %p1520
      $region38: #{tpu_custom_call.1} parent=5 // pred_check_branch
        %1523 = sbr.rel (%p1521) target = $region40
      $region39: #{tpu_custom_call.1} parent=5 // pred_region
        %s1524 = ssub.s32 %s14, 2
        // Predicated region
        $region41: #{tpu_custom_call.1} parent=39 // pred_check
          %p1525 = pneg %p101
        $region42: #{tpu_custom_call.1} parent=39 // pred_check_branch
          %1527 = sbr.rel (%p1525) target = $region44
        $region43: #{tpu_custom_call.1} parent=39 // pred_region
          %s1528 = sand.u32 %s86, 1
          %s1529 = scalar_lea.sflag [#allocation8], %s1528
          %s1530 = sand.u32 %s86, 1
          %s1531 = smul.addr %s1530, 32
          %s1532 = scalar_lea.vmem [#allocation9], %s1531
          %1533 = dma.done %s1529, 512
        $region44: #{tpu_custom_call.1} parent=39 // pred_fallthru
          _
      $region40: #{tpu_custom_call.1} parent=5 // pred_fallthru
        _
    $region6: #{tpu_custom_call.1} parent=1 // loop_footer
      %s18 = sadd.s32 1, %s14
    $region7: #{tpu_custom_call.1} parent=1 // loop_footer_branch
      %13 = sbr.rel target = $region3
    $region8: #{tpu_custom_call.1} parent=1 // loop_exit
      _
    %1534 = vsyncpa [#allocation7], 1
    %s1535 = scalar_lea.sflag [#allocation7], 1
    %1536 = vsyncpa %s1535, 1
    %1537 = vsyncpa [#allocation8], 1
    %s1538 = scalar_lea.sflag [#allocation8], 1
    %1539 = vsyncpa %s1538, 1
  %1540 = vsyncmov [#allocation3]
  %s1541 = vpop.sfrf %1540
  %p1542 = scmp.eq.s32.totalorder %s1541, 0
  %p1543 = pneg %p1542
  %1545 = shalt.err (%p1543)

</llo_original>
